<compile_context>
chip_gen: v6e
topology: v6e:2x2x1
jax: 0.10.0
libtpu: 0.0.40
codegen_flags: <defaults>
</compile_context>

<pallas_src>
import functools

import jax
import jax.numpy as jnp
from jax.experimental import pallas as pl
from jax.experimental.pallas import tpu as pltpu

IN_DIM = 784          # 28 * 28
H1, H2, H3 = 400, 400, 200
NUM_CLASSES = 10
OUT_PAD = 128         # lane-dense padded logits width
TILE_B_MAX = 256      # batch tile (matches v7x MXU M dim; fits easily in VMEM)
_NEG_BIG = -1e30      # finite "-inf" for masked (padded) logit lanes


def _round_up(n, m):
    return ((n + m - 1) // m) * m


def mlp_kernel(x_ref, w1_ref, b1_ref, w2_ref, b2_ref,
               w3_ref, b3_ref, w4_ref, b4_ref, o_ref):
    # fc1 + ReLU   (bf16 operands, f32 accumulation on the MXU)
    h = jnp.dot(x_ref[...], w1_ref[...],
                preferred_element_type=jnp.float32) + b1_ref[...]
    h = jnp.maximum(h, 0.0).astype(jnp.bfloat16)
    # fc2 + ReLU
    h = jnp.dot(h, w2_ref[...],
                preferred_element_type=jnp.float32) + b2_ref[...]
    h = jnp.maximum(h, 0.0).astype(jnp.bfloat16)
    # fc3 + ReLU
    h = jnp.dot(h, w3_ref[...],
                preferred_element_type=jnp.float32) + b3_ref[...]
    h = jnp.maximum(h, 0.0).astype(jnp.bfloat16)
    # fc4 (logits, padded to OUT_PAD lanes)
    logits = jnp.dot(h, w4_ref[...],
                     preferred_element_type=jnp.float32) + b4_ref[...]
    # mask padded lanes so they do not affect the softmax normalization
    col = jax.lax.broadcasted_iota(jnp.int32, logits.shape, 1)
    logits = jnp.where(col < NUM_CLASSES, logits, _NEG_BIG)
    # numerically stable log_softmax over dim=1
    m = jnp.max(logits, axis=1, keepdims=True)
    z = logits - m
    lse = jnp.log(jnp.sum(jnp.exp(z), axis=1, keepdims=True))
    o_ref[...] = (z - lse).astype(o_ref.dtype)


@functools.partial(jax.jit, static_argnums=())
def net_forward(x_nchw, params):
    """x_nchw: (B, 1, 28, 28) float32. Returns (B, 10) log-probabilities (float32)."""
    B = x_nchw.shape[0]
    x = x_nchw.reshape(B, IN_DIM).astype(jnp.bfloat16)   # x.view(-1, 784), bf16 for MXU

    (w1, b1), (w2, b2), (w3, b3), (w4, b4) = params
    # Weights in bf16 (stored (in, out) = transpose of torch); biases stay f32 (tiny).
    w1 = w1.astype(jnp.bfloat16)
    w2 = w2.astype(jnp.bfloat16)
    w3 = w3.astype(jnp.bfloat16)
    # Pad fc4 to a lane-dense 128-wide output; padded lanes are masked in-kernel.
    w4p = jnp.zeros((H3, OUT_PAD), jnp.bfloat16).at[:, :NUM_CLASSES].set(
        w4.astype(jnp.bfloat16))
    b4p = jnp.zeros((1, OUT_PAD), jnp.float32).at[:, :NUM_CLASSES].set(b4)

    # Batch tiling: small batches get one sublane-aligned tile; large batches get
    # 256-row tiles pipelined across the grid.
    tile_b = min(TILE_B_MAX, _round_up(B, 8))
    padded_b = _round_up(B, tile_b)
    if padded_b != B:
        x = jnp.pad(x, ((0, padded_b - B), (0, 0)))
    grid = (padded_b // tile_b,)

    # Activations tiled on the batch axis; weights/biases use constant index maps so
    # they are fetched once and stay VMEM-resident across all batch tiles.
    x_spec = pl.BlockSpec((tile_b, IN_DIM), lambda i: (i, 0))
    const2 = lambda shape: pl.BlockSpec(shape, lambda i: (0, 0))
    in_specs = [
        x_spec,
        const2((IN_DIM, H1)), const2((1, H1)),
        const2((H1, H2)),     const2((1, H2)),
        const2((H2, H3)),     const2((1, H3)),
        const2((H3, OUT_PAD)), const2((1, OUT_PAD)),
    ]
    out_spec = pl.BlockSpec((tile_b, OUT_PAD), lambda i: (i, 0))

    flops = 2 * padded_b * (IN_DIM * H1 + H1 * H2 + H2 * H3 + H3 * OUT_PAD)
    bytes_accessed = (
        2 * (IN_DIM * H1 + H1 * H2 + H2 * H3 + H3 * OUT_PAD)        # bf16 weights
        + 4 * (H1 + H2 + H3 + OUT_PAD)                              # f32 biases
        + padded_b * (2 * IN_DIM + 4 * OUT_PAD)                     # x in, logprobs out
    )
    cost = pl.CostEstimate(flops=flops,
                           transcendentals=padded_b * OUT_PAD,
                           bytes_accessed=bytes_accessed)

    out_padded = pl.pallas_call(
        mlp_kernel,
        out_shape=jax.ShapeDtypeStruct((padded_b, OUT_PAD), jnp.float32),
        grid=grid,
        in_specs=in_specs,
        out_specs=out_spec,
        compiler_params=pltpu.CompilerParams(
            dimension_semantics=("parallel",),      # shard batch tiles across TCs (v7x)
            vmem_limit_bytes=64 * 1024 * 1024,
        ),
        cost_estimate=cost,
    )(x, w1, b1, w2, b2, w3, b3, w4p, b4p)

    return out_padded[:B, :NUM_CLASSES]


def init_params(key):
    """Deterministic init matching nn.Linear's U(-1/sqrt(in), 1/sqrt(in)); f32 master copy."""
    dims = [(IN_DIM, H1), (H1, H2), (H2, H3), (H3, NUM_CLASSES)]
    params = []
    for (din, dout) in dims:
        key, kw, kb = jax.random.split(key, 3)
        bound = 1.0 / jnp.sqrt(float(din))
        # stored as (in, out): transpose of torch's (out, in) weight
        w = jax.random.uniform(kw, (din, dout), jnp.float32, -bound, bound)
        # biases kept 2D (1, out) for clean TPU layout / broadcasting
        b = jax.random.uniform(kb, (1, dout), jnp.float32, -bound, bound)
        params.append((w, b))
    return params


def reference_forward(x_nchw, params):
    x = x_nchw.reshape(x_nchw.shape[0], IN_DIM)
    (w1, b1), (w2, b2), (w3, b3), (w4, b4) = params
    h = jax.nn.relu(x @ w1 + b1)
    h = jax.nn.relu(h @ w2 + b2)
    h = jax.nn.relu(h @ w3 + b3)
    logits = h @ w4 + b4
    return jax.nn.log_softmax(logits, axis=1)


if __name__ == "__main__":
    key = jax.random.PRNGKey(0)
    kx, kp = jax.random.split(key)
    # Small MNIST-like batch, NCHW
    x = jax.random.normal(kx, (2, 1, 28, 28), jnp.float32)
    params = init_params(kp)

    out = net_forward(x, params)
    out = jax.block_until_ready(out)

    ref = reference_forward(x, params)
    assert out.shape == (2, NUM_CLASSES)
    # bf16 matmuls (f32 accumulation) => loosened tolerance vs. f32 reference
    assert jnp.allclose(out, ref, atol=5e-2, rtol=5e-2)
    print("KERNEL_OK")
</pallas_src>

<mosaic_0001>
module attributes {stable_mosaic.version = 11 : i64} {
  func.func @mlp_kernel(%arg0: i32, %arg1: memref<8x784xbf16, #tpu.memory_space<vmem>>, %arg2: memref<784x400xbf16, #tpu.memory_space<vmem>>, %arg3: memref<1x400xf32, #tpu.memory_space<vmem>>, %arg4: memref<400x400xbf16, #tpu.memory_space<vmem>>, %arg5: memref<1x400xf32, #tpu.memory_space<vmem>>, %arg6: memref<400x200xbf16, #tpu.memory_space<vmem>>, %arg7: memref<1x200xf32, #tpu.memory_space<vmem>>, %arg8: memref<200x128xbf16, #tpu.memory_space<vmem>>, %arg9: memref<1x128xf32, #tpu.memory_space<vmem>>, %arg10: memref<8x128xf32, #tpu.memory_space<vmem>>) attributes {dimension_semantics = [#tpu.dimension_semantics<parallel>], iteration_bounds = array<i64: 1>, scalar_prefetch = 0 : i64, scratch_operands = 0 : i64, tpu.core_type = #tpu.core_type<tc>, window_params = [{transform_indices = @transform_0, window_bounds = array<i64: 8, 784>}, {pipeline_mode = #tpu.pipeline_mode<synchronous>, transform_indices = @transform_1, window_bounds = array<i64: 784, 400>}, {pipeline_mode = #tpu.pipeline_mode<synchronous>, transform_indices = @transform_2, window_bounds = array<i64: 1, 400>}, {pipeline_mode = #tpu.pipeline_mode<synchronous>, transform_indices = @transform_3, window_bounds = array<i64: 400, 400>}, {pipeline_mode = #tpu.pipeline_mode<synchronous>, transform_indices = @transform_4, window_bounds = array<i64: 1, 400>}, {pipeline_mode = #tpu.pipeline_mode<synchronous>, transform_indices = @transform_5, window_bounds = array<i64: 400, 200>}, {pipeline_mode = #tpu.pipeline_mode<synchronous>, transform_indices = @transform_6, window_bounds = array<i64: 1, 200>}, {pipeline_mode = #tpu.pipeline_mode<synchronous>, transform_indices = @transform_7, window_bounds = array<i64: 200, 128>}, {pipeline_mode = #tpu.pipeline_mode<synchronous>, transform_indices = @transform_8, window_bounds = array<i64: 1, 128>}, {transform_indices = @transform_9, window_bounds = array<i64: 8, 128>}]} {
    %c0 = arith.constant 0 : index
    %c0_0 = arith.constant 0 : index
    %0 = vector.load %arg1[%c0, %c0_0] : memref<8x784xbf16, #tpu.memory_space<vmem>>, vector<8x784xbf16>
    %c0_1 = arith.constant 0 : index
    %c0_2 = arith.constant 0 : index
    %1 = vector.load %arg2[%c0_1, %c0_2] : memref<784x400xbf16, #tpu.memory_space<vmem>>, vector<784x400xbf16>
    %cst = arith.constant dense<0.000000e+00> : vector<8x400xf32>
    %2 = tpu.matmul %0, %1, %cst {dimension_numbers = #tpu.dot_dimension_numbers<[1], [0], [0], [1], [0, 0, 1, 1], [], []>} : vector<8x784xbf16>, vector<784x400xbf16>, vector<8x400xf32> -> vector<8x400xf32>
    %c0_3 = arith.constant 0 : index
    %c0_4 = arith.constant 0 : index
    %3 = vector.load %arg3[%c0_3, %c0_4] : memref<1x400xf32, #tpu.memory_space<vmem>>, vector<1x400xf32>
    %4 = vector.broadcast %3 : vector<1x400xf32> to vector<8x400xf32>
    %5 = arith.addf %2, %4 : vector<8x400xf32>
    %cst_5 = arith.constant 0.000000e+00 : f32
    %6 = vector.broadcast %cst_5 : f32 to vector<8x400xf32>
    %7 = arith.maximumf %5, %6 : vector<8x400xf32>
    %8 = arith.truncf %7 : vector<8x400xf32> to vector<8x400xbf16>
    %c0_6 = arith.constant 0 : index
    %c0_7 = arith.constant 0 : index
    %9 = vector.load %arg4[%c0_6, %c0_7] : memref<400x400xbf16, #tpu.memory_space<vmem>>, vector<400x400xbf16>
    %cst_8 = arith.constant dense<0.000000e+00> : vector<8x400xf32>
    %10 = tpu.matmul %8, %9, %cst_8 {dimension_numbers = #tpu.dot_dimension_numbers<[1], [0], [0], [1], [0, 0, 1, 1], [], []>} : vector<8x400xbf16>, vector<400x400xbf16>, vector<8x400xf32> -> vector<8x400xf32>
    %c0_9 = arith.constant 0 : index
    %c0_10 = arith.constant 0 : index
    %11 = vector.load %arg5[%c0_9, %c0_10] : memref<1x400xf32, #tpu.memory_space<vmem>>, vector<1x400xf32>
    %12 = vector.broadcast %11 : vector<1x400xf32> to vector<8x400xf32>
    %13 = arith.addf %10, %12 : vector<8x400xf32>
    %cst_11 = arith.constant 0.000000e+00 : f32
    %14 = vector.broadcast %cst_11 : f32 to vector<8x400xf32>
    %15 = arith.maximumf %13, %14 : vector<8x400xf32>
    %16 = arith.truncf %15 : vector<8x400xf32> to vector<8x400xbf16>
    %c0_12 = arith.constant 0 : index
    %c0_13 = arith.constant 0 : index
    %17 = vector.load %arg6[%c0_12, %c0_13] : memref<400x200xbf16, #tpu.memory_space<vmem>>, vector<400x200xbf16>
    %cst_14 = arith.constant dense<0.000000e+00> : vector<8x200xf32>
    %18 = tpu.matmul %16, %17, %cst_14 {dimension_numbers = #tpu.dot_dimension_numbers<[1], [0], [0], [1], [0, 0, 1, 1], [], []>} : vector<8x400xbf16>, vector<400x200xbf16>, vector<8x200xf32> -> vector<8x200xf32>
    %c0_15 = arith.constant 0 : index
    %c0_16 = arith.constant 0 : index
    %19 = vector.load %arg7[%c0_15, %c0_16] : memref<1x200xf32, #tpu.memory_space<vmem>>, vector<1x200xf32>
    %20 = vector.broadcast %19 : vector<1x200xf32> to vector<8x200xf32>
    %21 = arith.addf %18, %20 : vector<8x200xf32>
    %cst_17 = arith.constant 0.000000e+00 : f32
    %22 = vector.broadcast %cst_17 : f32 to vector<8x200xf32>
    %23 = arith.maximumf %21, %22 : vector<8x200xf32>
    %24 = arith.truncf %23 : vector<8x200xf32> to vector<8x200xbf16>
    %c0_18 = arith.constant 0 : index
    %c0_19 = arith.constant 0 : index
    %25 = vector.load %arg8[%c0_18, %c0_19] : memref<200x128xbf16, #tpu.memory_space<vmem>>, vector<200x128xbf16>
    %cst_20 = arith.constant dense<0.000000e+00> : vector<8x128xf32>
    %26 = tpu.matmul %24, %25, %cst_20 {dimension_numbers = #tpu.dot_dimension_numbers<[1], [0], [0], [1], [0, 0, 1, 1], [], []>} : vector<8x200xbf16>, vector<200x128xbf16>, vector<8x128xf32> -> vector<8x128xf32>
    %c0_21 = arith.constant 0 : index
    %c0_22 = arith.constant 0 : index
    %27 = vector.load %arg9[%c0_21, %c0_22] : memref<1x128xf32, #tpu.memory_space<vmem>>, vector<1x128xf32>
    %28 = vector.broadcast %27 : vector<1x128xf32> to vector<8x128xf32>
    %29 = arith.addf %26, %28 : vector<8x128xf32>
    %30 = tpu.iota {dimensions = array<i32: 1>} : vector<8x128xi32>
    %c10_i32 = arith.constant 10 : i32
    %31 = vector.broadcast %c10_i32 : i32 to vector<8x128xi32>
    %32 = arith.cmpi slt, %30, %31 : vector<8x128xi32>
    %cst_23 = arith.constant -1.000000e+30 : f32
    %33 = vector.broadcast %cst_23 : f32 to vector<8x128xf32>
    %34 = arith.select %32, %29, %33 : vector<8x128xi1>, vector<8x128xf32>
    %cst_24 = arith.constant dense<0xFF800000> : vector<8xf32>
    %35 = vector.multi_reduction <maximumf>, %34, %cst_24 [1] : vector<8x128xf32> to vector<8xf32>
    %36 = vector.shape_cast %35 : vector<8xf32> to vector<8x1xf32>
    %37 = vector.broadcast %36 : vector<8x1xf32> to vector<8x128xf32>
    %38 = arith.subf %34, %37 : vector<8x128xf32>
    %39 = math.exp %38 : vector<8x128xf32>
    %cst_25 = arith.constant dense<0.000000e+00> : vector<8xf32>
    %40 = vector.multi_reduction <add>, %39, %cst_25 [1] : vector<8x128xf32> to vector<8xf32>
    %41 = vector.shape_cast %40 : vector<8xf32> to vector<8x1xf32>
    %42 = math.log %41 : vector<8x1xf32>
    %43 = vector.broadcast %42 : vector<8x1xf32> to vector<8x128xf32>
    %44 = arith.subf %38, %43 : vector<8x128xf32>
    %c0_26 = arith.constant 0 : index
    %c0_27 = arith.constant 0 : index
    %45 = vector.load %arg10[%c0_26, %c0_27] : memref<8x128xf32, #tpu.memory_space<vmem>>, vector<8x128xf32>
    tpu.vector_store %arg10[%c0_26, %c0_27], %44 {strides = array<i32>} : memref<8x128xf32, #tpu.memory_space<vmem>>, vector<8x128xf32>,
    return
  }
  func.func @transform_0(%arg0: i32) -> (i32, i32) {
    %c0_i32 = arith.constant 0 : i32
    %c0_i32_0 = arith.constant 0 : i32
    return %arg0, %c0_i32 : i32, i32
  }
  func.func @transform_1(%arg0: i32) -> (i32, i32) {
    %c0_i32 = arith.constant 0 : i32
    %c0_i32_0 = arith.constant 0 : i32
    %c0_i32_1 = arith.constant 0 : i32
    return %c0_i32, %c0_i32_0 : i32, i32
  }
  func.func @transform_2(%arg0: i32) -> (i32, i32) {
    %c0_i32 = arith.constant 0 : i32
    %c0_i32_0 = arith.constant 0 : i32
    %c0_i32_1 = arith.constant 0 : i32
    return %c0_i32, %c0_i32_0 : i32, i32
  }
  func.func @transform_3(%arg0: i32) -> (i32, i32) {
    %c0_i32 = arith.constant 0 : i32
    %c0_i32_0 = arith.constant 0 : i32
    %c0_i32_1 = arith.constant 0 : i32
    return %c0_i32, %c0_i32_0 : i32, i32
  }
  func.func @transform_4(%arg0: i32) -> (i32, i32) {
    %c0_i32 = arith.constant 0 : i32
    %c0_i32_0 = arith.constant 0 : i32
    %c0_i32_1 = arith.constant 0 : i32
    return %c0_i32, %c0_i32_0 : i32, i32
  }
  func.func @transform_5(%arg0: i32) -> (i32, i32) {
    %c0_i32 = arith.constant 0 : i32
    %c0_i32_0 = arith.constant 0 : i32
    %c0_i32_1 = arith.constant 0 : i32
    return %c0_i32, %c0_i32_0 : i32, i32
  }
  func.func @transform_6(%arg0: i32) -> (i32, i32) {
    %c0_i32 = arith.constant 0 : i32
    %c0_i32_0 = arith.constant 0 : i32
    %c0_i32_1 = arith.constant 0 : i32
    return %c0_i32, %c0_i32_0 : i32, i32
  }
  func.func @transform_7(%arg0: i32) -> (i32, i32) {
    %c0_i32 = arith.constant 0 : i32
    %c0_i32_0 = arith.constant 0 : i32
    %c0_i32_1 = arith.constant 0 : i32
    return %c0_i32, %c0_i32_0 : i32, i32
  }
  func.func @transform_8(%arg0: i32) -> (i32, i32) {
    %c0_i32 = arith.constant 0 : i32
    %c0_i32_0 = arith.constant 0 : i32
    %c0_i32_1 = arith.constant 0 : i32
    return %c0_i32, %c0_i32_0 : i32, i32
  }
  func.func @transform_9(%arg0: i32) -> (i32, i32) {
    %c0_i32 = arith.constant 0 : i32
    %c0_i32_0 = arith.constant 0 : i32
    return %arg0, %c0_i32 : i32, i32
  }
}

</mosaic_0001>

<llo_original>
// kernel: net_forward.1
$region0: #{net_forward.1}
  #allocation0 [shape = 'u32[]', space=smem, size = 0x4, offset = 0x4, fixed_abs, tag = 'smem constant byte address 0x4 - core index']
  #allocation1 [shape = 'u32[144,128]{1,0:T(1,128)}', space=vmem, size = 0x12000, scoped, tag = 'internal scratch']
  %s0 = inlined_call_operand.vmem [shape: bf16[8,784], index: 0, kind: input, shape index: {}]
  %s1 = inlined_call_operand.vmem [shape: bf16[784,400], index: 1, kind: input, shape index: {}]
  %s2 = inlined_call_operand.vmem [shape: f32[1,400], index: 2, kind: input, shape index: {}]
  %s3 = inlined_call_operand.vmem [shape: bf16[400,400], index: 3, kind: input, shape index: {}]
  %s4 = inlined_call_operand.vmem [shape: f32[1,400], index: 4, kind: input, shape index: {}]
  %s5 = inlined_call_operand.vmem [shape: bf16[400,200], index: 5, kind: input, shape index: {}]
  %s6 = inlined_call_operand.vmem [shape: f32[1,200], index: 6, kind: input, shape index: {}]
  %s7 = inlined_call_operand.vmem [shape: bf16[200,128], index: 7, kind: input, shape index: {}]
  %s8 = inlined_call_operand.vmem [shape: f32[1,128], index: 8, kind: input, shape index: {}]
  %s9 = inlined_call_operand.vmem [shape: f32[8,128], index: 9, kind: output, shape index: {}]
  %s10 = sld [smem:[#allocation0]]
  $region46: #{net_forward.1} parent=0
    _
  %s12 = ssub.s32 1, %s10
  %s13 = scalar_select 0, %s12, %s10
  // Predicated region
  $region2: #{net_forward.1} parent=0 // pred_check
    _
  $region3: #{net_forward.1} parent=0 // pred_check_branch
    %15 = sbr.rel (0) target = $region5
  $region4: #{net_forward.1} parent=0 // pred_region
    _
  $region5: #{net_forward.1} parent=0 // pred_fallthru
    _
  // Predicated region
  $region6: #{net_forward.1} parent=0 // pred_check
    _
  $region7: #{net_forward.1} parent=0 // pred_check_branch
    %17 = sbr.rel (0) target = $region9
  $region8: #{net_forward.1} parent=0 // pred_region
    _
  $region9: #{net_forward.1} parent=0 // pred_fallthru
    _
  // Predicated region
  $region10: #{net_forward.1} parent=0 // pred_check
    _
  $region11: #{net_forward.1} parent=0 // pred_check_branch
    %19 = sbr.rel (0) target = $region13
  $region12: #{net_forward.1} parent=0 // pred_region
    _
  $region13: #{net_forward.1} parent=0 // pred_fallthru
    _
  // Predicated region
  $region14: #{net_forward.1} parent=0 // pred_check
    _
  $region15: #{net_forward.1} parent=0 // pred_check_branch
    %21 = sbr.rel (0) target = $region17
  $region16: #{net_forward.1} parent=0 // pred_region
    _
  $region17: #{net_forward.1} parent=0 // pred_fallthru
    _
  // Predicated region
  $region18: #{net_forward.1} parent=0 // pred_check
    _
  $region19: #{net_forward.1} parent=0 // pred_check_branch
    %23 = sbr.rel (0) target = $region21
  $region20: #{net_forward.1} parent=0 // pred_region
    _
  $region21: #{net_forward.1} parent=0 // pred_fallthru
    _
  // Predicated region
  $region22: #{net_forward.1} parent=0 // pred_check
    _
  $region23: #{net_forward.1} parent=0 // pred_check_branch
    %25 = sbr.rel (0) target = $region25
  $region24: #{net_forward.1} parent=0 // pred_region
    _
  $region25: #{net_forward.1} parent=0 // pred_fallthru
    _
  // Predicated region
  $region26: #{net_forward.1} parent=0 // pred_check
    _
  $region27: #{net_forward.1} parent=0 // pred_check_branch
    %27 = sbr.rel (0) target = $region29
  $region28: #{net_forward.1} parent=0 // pred_region
    _
  $region29: #{net_forward.1} parent=0 // pred_fallthru
    _
  // Predicated region
  $region30: #{net_forward.1} parent=0 // pred_check
    _
  $region31: #{net_forward.1} parent=0 // pred_check_branch
    %29 = sbr.rel (0) target = $region33
  $region32: #{net_forward.1} parent=0 // pred_region
    _
  $region33: #{net_forward.1} parent=0 // pred_fallthru
    _
  // Predicated region
  $region34: #{net_forward.1} parent=0 // pred_check
    _
  $region35: #{net_forward.1} parent=0 // pred_check_branch
    %31 = sbr.rel (0) target = $region37
  $region36: #{net_forward.1} parent=0 // pred_region
    _
  $region37: #{net_forward.1} parent=0 // pred_fallthru
    _
  %v33 = vld [vmem:[%s0] sm:$0xff]
  %v34 = vld [vmem:[%s0 + $0x8] sm:$0xff]
  %v35 = vld [vmem:[%s0 + $0x10] sm:$0xff]
  %v36 = vld [vmem:[%s0 + $0x18] sm:$0xf]
  %v37 = vld [vmem:[%s1] sm:$0xff]
  %v38 = vld [vmem:[%s1 + $0x8] sm:$0xff]
  %v39 = vld [vmem:[%s1 + $0x10] sm:$0xff]
  %v40 = vld [vmem:[%s1 + $0x18] sm:$0xff]
  %v41 = vld [vmem:[%s1 + $0x20] sm:$0xff]
  %v42 = vld [vmem:[%s1 + $0x28] sm:$0xff]
  %v43 = vld [vmem:[%s1 + $0x30] sm:$0xff]
  %v44 = vld [vmem:[%s1 + $0x38] sm:$0xff]
  %v45 = vld [vmem:[%s1 + $0x40] sm:$0xff]
  %v46 = vld [vmem:[%s1 + $0x48] sm:$0xff]
  %v47 = vld [vmem:[%s1 + $0x50] sm:$0xff]
  %v48 = vld [vmem:[%s1 + $0x58] sm:$0xff]
  %v49 = vld [vmem:[%s1 + $0x60] sm:$0xff]
  %v50 = vld [vmem:[%s1 + $0x68] sm:$0xff]
  %v51 = vld [vmem:[%s1 + $0x70] sm:$0xff]
  %v52 = vld [vmem:[%s1 + $0x78] sm:$0xff]
  %v53 = vld [vmem:[%s1 + $0x80] sm:$0xff]
  %v54 = vld [vmem:[%s1 + $0x88] sm:$0xff]
  %v55 = vld [vmem:[%s1 + $0x90] sm:$0xff]
  %v56 = vld [vmem:[%s1 + $0x98] sm:$0xff]
  %v57 = vld [vmem:[%s1 + $0xa0] sm:$0xff]
  %v58 = vld [vmem:[%s1 + $0xa8] sm:$0xff]
  %v59 = vld [vmem:[%s1 + $0xb0] sm:$0xff]
  %v60 = vld [vmem:[%s1 + $0xb8] sm:$0xff]
  %v61 = vld [vmem:[%s1 + $0xc0] sm:$0xff]
  %v62 = vld [vmem:[%s1 + $0xc8] sm:$0xff]
  %v63 = vld [vmem:[%s1 + $0xd0] sm:$0xff]
  %v64 = vld [vmem:[%s1 + $0xd8] sm:$0xff]
  %v65 = vld [vmem:[%s1 + $0xe0] sm:$0xff]
  %v66 = vld [vmem:[%s1 + $0xe8] sm:$0xff]
  %v67 = vld [vmem:[%s1 + $0xf0] sm:$0xff]
  %v68 = vld [vmem:[%s1 + $0xf8] sm:$0xff]
  %v69 = vld [vmem:[%s1 + $0x100] sm:$0xff]
  %v70 = vld [vmem:[%s1 + $0x108] sm:$0xff]
  %v71 = vld [vmem:[%s1 + $0x110] sm:$0xff]
  %v72 = vld [vmem:[%s1 + $0x118] sm:$0xff]
  %v73 = vld [vmem:[%s1 + $0x120] sm:$0xff]
  %v74 = vld [vmem:[%s1 + $0x128] sm:$0xff]
  %v75 = vld [vmem:[%s1 + $0x130] sm:$0xff]
  %v76 = vld [vmem:[%s1 + $0x138] sm:$0xff]
  %v77 = vld [vmem:[%s1 + $0x140] sm:$0xff]
  %v78 = vld [vmem:[%s1 + $0x148] sm:$0xff]
  %v79 = vld [vmem:[%s1 + $0x150] sm:$0xff]
  %v80 = vld [vmem:[%s1 + $0x158] sm:$0xff]
  %v81 = vld [vmem:[%s1 + $0x160] sm:$0xff]
  %v82 = vld [vmem:[%s1 + $0x168] sm:$0xff]
  %v83 = vld [vmem:[%s1 + $0x170] sm:$0xff]
  %v84 = vld [vmem:[%s1 + $0x178] sm:$0xff]
  %v85 = vld [vmem:[%s1 + $0x180] sm:$0xff]
  %v86 = vld [vmem:[%s1 + $0x188] sm:$0xff]
  %v87 = vld [vmem:[%s1 + $0x190] sm:$0xff]
  %v88 = vld [vmem:[%s1 + $0x198] sm:$0xff]
  %v89 = vld [vmem:[%s1 + $0x1a0] sm:$0xff]
  %v90 = vld [vmem:[%s1 + $0x1a8] sm:$0xff]
  %v91 = vld [vmem:[%s1 + $0x1b0] sm:$0xff]
  %v92 = vld [vmem:[%s1 + $0x1b8] sm:$0xff]
  %v93 = vld [vmem:[%s1 + $0x1c0] sm:$0xff]
  %v94 = vld [vmem:[%s1 + $0x1c8] sm:$0xff]
  %v95 = vld [vmem:[%s1 + $0x1d0] sm:$0xff]
  %v96 = vld [vmem:[%s1 + $0x1d8] sm:$0xff]
  %v97 = vld [vmem:[%s1 + $0x1e0] sm:$0xff]
  %v98 = vld [vmem:[%s1 + $0x1e8] sm:$0xff]
  %v99 = vld [vmem:[%s1 + $0x1f0] sm:$0xff]
  %v100 = vld [vmem:[%s1 + $0x1f8] sm:$0xff]
  %v101 = vld [vmem:[%s1 + $0x200] sm:$0xff]
  %v102 = vld [vmem:[%s1 + $0x208] sm:$0xff]
  %v103 = vld [vmem:[%s1 + $0x210] sm:$0xff]
  %v104 = vld [vmem:[%s1 + $0x218] sm:$0xff]
  %v105 = vld [vmem:[%s1 + $0x220] sm:$0xff]
  %v106 = vld [vmem:[%s1 + $0x228] sm:$0xff]
  %v107 = vld [vmem:[%s1 + $0x230] sm:$0xff]
  %v108 = vld [vmem:[%s1 + $0x238] sm:$0xff]
  %v109 = vld [vmem:[%s1 + $0x240] sm:$0xff]
  %v110 = vld [vmem:[%s1 + $0x248] sm:$0xff]
  %v111 = vld [vmem:[%s1 + $0x250] sm:$0xff]
  %v112 = vld [vmem:[%s1 + $0x258] sm:$0xff]
  %v113 = vld [vmem:[%s1 + $0x260] sm:$0xff]
  %v114 = vld [vmem:[%s1 + $0x268] sm:$0xff]
  %v115 = vld [vmem:[%s1 + $0x270] sm:$0xff]
  %v116 = vld [vmem:[%s1 + $0x278] sm:$0xff]
  %v117 = vld [vmem:[%s1 + $0x280] sm:$0xff]
  %v118 = vld [vmem:[%s1 + $0x288] sm:$0xff]
  %v119 = vld [vmem:[%s1 + $0x290] sm:$0xff]
  %v120 = vld [vmem:[%s1 + $0x298] sm:$0xff]
  %v121 = vld [vmem:[%s1 + $0x2a0] sm:$0xff]
  %v122 = vld [vmem:[%s1 + $0x2a8] sm:$0xff]
  %v123 = vld [vmem:[%s1 + $0x2b0] sm:$0xff]
  %v124 = vld [vmem:[%s1 + $0x2b8] sm:$0xff]
  %v125 = vld [vmem:[%s1 + $0x2c0] sm:$0xff]
  %v126 = vld [vmem:[%s1 + $0x2c8] sm:$0xff]
  %v127 = vld [vmem:[%s1 + $0x2d0] sm:$0xff]
  %v128 = vld [vmem:[%s1 + $0x2d8] sm:$0xff]
  %v129 = vld [vmem:[%s1 + $0x2e0] sm:$0xff]
  %v130 = vld [vmem:[%s1 + $0x2e8] sm:$0xff]
  %v131 = vld [vmem:[%s1 + $0x2f0] sm:$0xff]
  %v132 = vld [vmem:[%s1 + $0x2f8] sm:$0xff]
  %v133 = vld [vmem:[%s1 + $0x300] sm:$0xff]
  %v134 = vld [vmem:[%s1 + $0x308] sm:$0xff]
  %v135 = vld [vmem:[%s1 + $0x310] sm:$0xff]
  %v136 = vld [vmem:[%s1 + $0x318] sm:$0xff]
  %v137 = vld [vmem:[%s1 + $0x320] sm:$0xff]
  %v138 = vld [vmem:[%s1 + $0x328] sm:$0xff]
  %v139 = vld [vmem:[%s1 + $0x330] sm:$0xff]
  %v140 = vld [vmem:[%s1 + $0x338] sm:$0xff]
  %v141 = vld [vmem:[%s1 + $0x340] sm:$0xff]
  %v142 = vld [vmem:[%s1 + $0x348] sm:$0xff]
  %v143 = vld [vmem:[%s1 + $0x350] sm:$0xff]
  %v144 = vld [vmem:[%s1 + $0x358] sm:$0xff]
  %v145 = vld [vmem:[%s1 + $0x360] sm:$0xff]
  %v146 = vld [vmem:[%s1 + $0x368] sm:$0xff]
  %v147 = vld [vmem:[%s1 + $0x370] sm:$0xff]
  %v148 = vld [vmem:[%s1 + $0x378] sm:$0xff]
  %v149 = vld [vmem:[%s1 + $0x380] sm:$0xff]
  %v150 = vld [vmem:[%s1 + $0x388] sm:$0xff]
  %v151 = vld [vmem:[%s1 + $0x390] sm:$0xff]
  %v152 = vld [vmem:[%s1 + $0x398] sm:$0xff]
  %v153 = vld [vmem:[%s1 + $0x3a0] sm:$0xff]
  %v154 = vld [vmem:[%s1 + $0x3a8] sm:$0xff]
  %v155 = vld [vmem:[%s1 + $0x3b0] sm:$0xff]
  %v156 = vld [vmem:[%s1 + $0x3b8] sm:$0xff]
  %v157 = vld [vmem:[%s1 + $0x3c0] sm:$0xff]
  %v158 = vld [vmem:[%s1 + $0x3c8] sm:$0xff]
  %v159 = vld [vmem:[%s1 + $0x3d0] sm:$0xff]
  %v160 = vld [vmem:[%s1 + $0x3d8] sm:$0xff]
  %v161 = vld [vmem:[%s1 + $0x3e0] sm:$0xff]
  %v162 = vld [vmem:[%s1 + $0x3e8] sm:$0xff]
  %v163 = vld [vmem:[%s1 + $0x3f0] sm:$0xff]
  %v164 = vld [vmem:[%s1 + $0x3f8] sm:$0xff]
  %v165 = vld [vmem:[%s1 + $0x400] sm:$0xff]
  %v166 = vld [vmem:[%s1 + $0x408] sm:$0xff]
  %v167 = vld [vmem:[%s1 + $0x410] sm:$0xff]
  %v168 = vld [vmem:[%s1 + $0x418] sm:$0xff]
  %v169 = vld [vmem:[%s1 + $0x420] sm:$0xff]
  %v170 = vld [vmem:[%s1 + $0x428] sm:$0xff]
  %v171 = vld [vmem:[%s1 + $0x430] sm:$0xff]
  %v172 = vld [vmem:[%s1 + $0x438] sm:$0xff]
  %v173 = vld [vmem:[%s1 + $0x440] sm:$0xff]
  %v174 = vld [vmem:[%s1 + $0x448] sm:$0xff]
  %v175 = vld [vmem:[%s1 + $0x450] sm:$0xff]
  %v176 = vld [vmem:[%s1 + $0x458] sm:$0xff]
  %v177 = vld [vmem:[%s1 + $0x460] sm:$0xff]
  %v178 = vld [vmem:[%s1 + $0x468] sm:$0xff]
  %v179 = vld [vmem:[%s1 + $0x470] sm:$0xff]
  %v180 = vld [vmem:[%s1 + $0x478] sm:$0xff]
  %v181 = vld [vmem:[%s1 + $0x480] sm:$0xff]
  %v182 = vld [vmem:[%s1 + $0x488] sm:$0xff]
  %v183 = vld [vmem:[%s1 + $0x490] sm:$0xff]
  %v184 = vld [vmem:[%s1 + $0x498] sm:$0xff]
  %v185 = vld [vmem:[%s1 + $0x4a0] sm:$0xff]
  %v186 = vld [vmem:[%s1 + $0x4a8] sm:$0xff]
  %v187 = vld [vmem:[%s1 + $0x4b0] sm:$0xff]
  %v188 = vld [vmem:[%s1 + $0x4b8] sm:$0xff]
  %v189 = vld [vmem:[%s1 + $0x4c0] sm:$0xff]
  %v190 = vld [vmem:[%s1 + $0x4c8] sm:$0xff]
  %v191 = vld [vmem:[%s1 + $0x4d0] sm:$0xff]
  %v192 = vld [vmem:[%s1 + $0x4d8] sm:$0xff]
  %v193 = vld [vmem:[%s1 + $0x4e0] sm:$0xff]
  %v194 = vld [vmem:[%s1 + $0x4e8] sm:$0xff]
  %v195 = vld [vmem:[%s1 + $0x4f0] sm:$0xff]
  %v196 = vld [vmem:[%s1 + $0x4f8] sm:$0xff]
  %v197 = vld [vmem:[%s1 + $0x500] sm:$0xff]
  %v198 = vld [vmem:[%s1 + $0x508] sm:$0xff]
  %v199 = vld [vmem:[%s1 + $0x510] sm:$0xff]
  %v200 = vld [vmem:[%s1 + $0x518] sm:$0xff]
  %v201 = vld [vmem:[%s1 + $0x520] sm:$0xff]
  %v202 = vld [vmem:[%s1 + $0x528] sm:$0xff]
  %v203 = vld [vmem:[%s1 + $0x530] sm:$0xff]
  %v204 = vld [vmem:[%s1 + $0x538] sm:$0xff]
  %v205 = vld [vmem:[%s1 + $0x540] sm:$0xff]
  %v206 = vld [vmem:[%s1 + $0x548] sm:$0xff]
  %v207 = vld [vmem:[%s1 + $0x550] sm:$0xff]
  %v208 = vld [vmem:[%s1 + $0x558] sm:$0xff]
  %v209 = vld [vmem:[%s1 + $0x560] sm:$0xff]
  %v210 = vld [vmem:[%s1 + $0x568] sm:$0xff]
  %v211 = vld [vmem:[%s1 + $0x570] sm:$0xff]
  %v212 = vld [vmem:[%s1 + $0x578] sm:$0xff]
  %v213 = vld [vmem:[%s1 + $0x580] sm:$0xff]
  %v214 = vld [vmem:[%s1 + $0x588] sm:$0xff]
  %v215 = vld [vmem:[%s1 + $0x590] sm:$0xff]
  %v216 = vld [vmem:[%s1 + $0x598] sm:$0xff]
  %v217 = vld [vmem:[%s1 + $0x5a0] sm:$0xff]
  %v218 = vld [vmem:[%s1 + $0x5a8] sm:$0xff]
  %v219 = vld [vmem:[%s1 + $0x5b0] sm:$0xff]
  %v220 = vld [vmem:[%s1 + $0x5b8] sm:$0xff]
  %v221 = vld [vmem:[%s1 + $0x5c0] sm:$0xff]
  %v222 = vld [vmem:[%s1 + $0x5c8] sm:$0xff]
  %v223 = vld [vmem:[%s1 + $0x5d0] sm:$0xff]
  %v224 = vld [vmem:[%s1 + $0x5d8] sm:$0xff]
  %v225 = vld [vmem:[%s1 + $0x5e0] sm:$0xff]
  %v226 = vld [vmem:[%s1 + $0x5e8] sm:$0xff]
  %v227 = vld [vmem:[%s1 + $0x5f0] sm:$0xff]
  %v228 = vld [vmem:[%s1 + $0x5f8] sm:$0xff]
  %v229 = vld [vmem:[%s1 + $0x600] sm:$0xff]
  %v230 = vld [vmem:[%s1 + $0x608] sm:$0xff]
  %v231 = vld [vmem:[%s1 + $0x610] sm:$0xff]
  %v232 = vld [vmem:[%s1 + $0x618] sm:$0xff]
  %v233 = vld [vmem:[%s2] sm:$0xf]
  %v235 = vlaneseq
  %v236 = vshrl.u32 %v235, 7
  %v237 = vsub.s32 0, %v236
  %v238 = vrot.slane %v233, %v237
  %v239 = vlaneseq
  %v240 = vshrl.u32 %v239, 7
  %v241 = vsub.s32 1, %v240
  %v242 = vrot.slane %v233, %v241
  %v243 = vlaneseq
  %v244 = vshrl.u32 %v243, 7
  %v245 = vsub.s32 2, %v244
  %v246 = vrot.slane %v233, %v245
  %v247 = vlaneseq
  %v248 = vshrl.u32 %v247, 7
  %v249 = vsub.s32 3, %v248
  %v250 = vrot.slane %v233, %v249
  %v259 = vunpack.c.l.b16 %v33
  %v260 = vunpack.c.h.b16 %v33
  %v261 = vunpack.c.l.b16 %v34
  %v262 = vunpack.c.h.b16 %v34
  %v263 = vunpack.c.l.b16 %v35
  %v264 = vunpack.c.h.b16 %v35
  %v265 = vunpack.c.l.b16 %v36
  %v266 = vpack.c.b16 %v259, %v259
  %v267 = vpack.c.b16 %v260, %v260
  %v268 = vpack.c.b16 %v261, %v261
  %v269 = vpack.c.b16 %v262, %v262
  %v270 = vpack.c.b16 %v263, %v263
  %v271 = vpack.c.b16 %v264, %v264
  %v272 = vpack.c.b16 %v265, %v265
  %v475 = vunpack.c.l.b16 %v37
  %v476 = vunpack.c.h.b16 %v37
  %v477 = vunpack.c.l.b16 %v38
  %v478 = vunpack.c.h.b16 %v38
  %v479 = vunpack.c.l.b16 %v39
  %v480 = vunpack.c.h.b16 %v39
  %v481 = vunpack.c.l.b16 %v40
  %v482 = vunpack.c.h.b16 %v40
  %v483 = vunpack.c.l.b16 %v41
  %v484 = vunpack.c.h.b16 %v41
  %v485 = vunpack.c.l.b16 %v42
  %v486 = vunpack.c.h.b16 %v42
  %v487 = vunpack.c.l.b16 %v43
  %v488 = vunpack.c.h.b16 %v43
  %v489 = vunpack.c.l.b16 %v44
  %v490 = vunpack.c.h.b16 %v44
  %v491 = vunpack.c.l.b16 %v45
  %v492 = vunpack.c.h.b16 %v45
  %v493 = vunpack.c.l.b16 %v46
  %v494 = vunpack.c.h.b16 %v46
  %v495 = vunpack.c.l.b16 %v47
  %v496 = vunpack.c.h.b16 %v47
  %v497 = vunpack.c.l.b16 %v48
  %v498 = vunpack.c.h.b16 %v48
  %v499 = vunpack.c.l.b16 %v49
  %v500 = vunpack.c.h.b16 %v49
  %v501 = vunpack.c.l.b16 %v50
  %v502 = vunpack.c.h.b16 %v50
  %v503 = vunpack.c.l.b16 %v51
  %v504 = vunpack.c.h.b16 %v51
  %v505 = vunpack.c.l.b16 %v52
  %v506 = vunpack.c.h.b16 %v52
  %v507 = vunpack.c.l.b16 %v53
  %v508 = vunpack.c.h.b16 %v53
  %v509 = vunpack.c.l.b16 %v54
  %v510 = vunpack.c.h.b16 %v54
  %v511 = vunpack.c.l.b16 %v55
  %v512 = vunpack.c.h.b16 %v55
  %v513 = vunpack.c.l.b16 %v56
  %v514 = vunpack.c.h.b16 %v56
  %v515 = vunpack.c.l.b16 %v57
  %v516 = vunpack.c.h.b16 %v57
  %v517 = vunpack.c.l.b16 %v58
  %v518 = vunpack.c.h.b16 %v58
  %v519 = vunpack.c.l.b16 %v59
  %v520 = vunpack.c.h.b16 %v59
  %v521 = vunpack.c.l.b16 %v60
  %v522 = vunpack.c.h.b16 %v60
  %v523 = vunpack.c.l.b16 %v61
  %v524 = vunpack.c.h.b16 %v61
  %v525 = vunpack.c.l.b16 %v62
  %v526 = vunpack.c.h.b16 %v62
  %v527 = vunpack.c.l.b16 %v63
  %v528 = vunpack.c.h.b16 %v63
  %v529 = vunpack.c.l.b16 %v64
  %v530 = vunpack.c.h.b16 %v64
  %v531 = vunpack.c.l.b16 %v65
  %v532 = vunpack.c.h.b16 %v65
  %v533 = vunpack.c.l.b16 %v66
  %v534 = vunpack.c.h.b16 %v66
  %v535 = vunpack.c.l.b16 %v67
  %v536 = vunpack.c.h.b16 %v67
  %v537 = vunpack.c.l.b16 %v68
  %v538 = vunpack.c.h.b16 %v68
  %v539 = vunpack.c.l.b16 %v69
  %v540 = vunpack.c.h.b16 %v69
  %v541 = vunpack.c.l.b16 %v70
  %v542 = vunpack.c.h.b16 %v70
  %v543 = vunpack.c.l.b16 %v71
  %v544 = vunpack.c.h.b16 %v71
  %v545 = vunpack.c.l.b16 %v72
  %v546 = vunpack.c.h.b16 %v72
  %v547 = vunpack.c.l.b16 %v73
  %v548 = vunpack.c.h.b16 %v73
  %v549 = vunpack.c.l.b16 %v74
  %v550 = vunpack.c.h.b16 %v74
  %v551 = vunpack.c.l.b16 %v75
  %v552 = vunpack.c.h.b16 %v75
  %v553 = vunpack.c.l.b16 %v76
  %v554 = vunpack.c.h.b16 %v76
  %v555 = vunpack.c.l.b16 %v77
  %v556 = vunpack.c.h.b16 %v77
  %v557 = vunpack.c.l.b16 %v78
  %v558 = vunpack.c.h.b16 %v78
  %v559 = vunpack.c.l.b16 %v79
  %v560 = vunpack.c.h.b16 %v79
  %v561 = vunpack.c.l.b16 %v80
  %v562 = vunpack.c.h.b16 %v80
  %v563 = vunpack.c.l.b16 %v81
  %v564 = vunpack.c.h.b16 %v81
  %v565 = vunpack.c.l.b16 %v82
  %v566 = vunpack.c.h.b16 %v82
  %v567 = vunpack.c.l.b16 %v83
  %v568 = vunpack.c.h.b16 %v83
  %v569 = vunpack.c.l.b16 %v84
  %v570 = vunpack.c.h.b16 %v84
  %v571 = vunpack.c.l.b16 %v85
  %v572 = vunpack.c.h.b16 %v85
  %v573 = vunpack.c.l.b16 %v86
  %v574 = vunpack.c.h.b16 %v86
  %v575 = vunpack.c.l.b16 %v87
  %v576 = vunpack.c.h.b16 %v87
  %v577 = vunpack.c.l.b16 %v88
  %v578 = vunpack.c.h.b16 %v88
  %v579 = vunpack.c.l.b16 %v89
  %v580 = vunpack.c.h.b16 %v89
  %v581 = vunpack.c.l.b16 %v90
  %v582 = vunpack.c.h.b16 %v90
  %v583 = vunpack.c.l.b16 %v91
  %v584 = vunpack.c.h.b16 %v91
  %v585 = vunpack.c.l.b16 %v92
  %v586 = vunpack.c.h.b16 %v92
  %v587 = vunpack.c.l.b16 %v93
  %v588 = vunpack.c.h.b16 %v93
  %v589 = vunpack.c.l.b16 %v94
  %v590 = vunpack.c.h.b16 %v94
  %v591 = vunpack.c.l.b16 %v95
  %v592 = vunpack.c.h.b16 %v95
  %v593 = vunpack.c.l.b16 %v96
  %v594 = vunpack.c.h.b16 %v96
  %v595 = vunpack.c.l.b16 %v97
  %v596 = vunpack.c.h.b16 %v97
  %v597 = vunpack.c.l.b16 %v98
  %v598 = vunpack.c.h.b16 %v98
  %v599 = vunpack.c.l.b16 %v99
  %v600 = vunpack.c.h.b16 %v99
  %v601 = vunpack.c.l.b16 %v100
  %v602 = vunpack.c.h.b16 %v100
  %v603 = vunpack.c.l.b16 %v101
  %v604 = vunpack.c.h.b16 %v101
  %v605 = vunpack.c.l.b16 %v102
  %v606 = vunpack.c.h.b16 %v102
  %v607 = vunpack.c.l.b16 %v103
  %v608 = vunpack.c.h.b16 %v103
  %v609 = vunpack.c.l.b16 %v104
  %v610 = vunpack.c.h.b16 %v104
  %v611 = vunpack.c.l.b16 %v105
  %v612 = vunpack.c.h.b16 %v105
  %v613 = vunpack.c.l.b16 %v106
  %v614 = vunpack.c.h.b16 %v106
  %v615 = vunpack.c.l.b16 %v107
  %v616 = vunpack.c.h.b16 %v107
  %v617 = vunpack.c.l.b16 %v108
  %v618 = vunpack.c.h.b16 %v108
  %v619 = vunpack.c.l.b16 %v109
  %v620 = vunpack.c.h.b16 %v109
  %v621 = vunpack.c.l.b16 %v110
  %v622 = vunpack.c.h.b16 %v110
  %v623 = vunpack.c.l.b16 %v111
  %v624 = vunpack.c.h.b16 %v111
  %v625 = vunpack.c.l.b16 %v112
  %v626 = vunpack.c.h.b16 %v112
  %v627 = vunpack.c.l.b16 %v113
  %v628 = vunpack.c.h.b16 %v113
  %v629 = vunpack.c.l.b16 %v114
  %v630 = vunpack.c.h.b16 %v114
  %v631 = vunpack.c.l.b16 %v115
  %v632 = vunpack.c.h.b16 %v115
  %v633 = vunpack.c.l.b16 %v116
  %v634 = vunpack.c.h.b16 %v116
  %v635 = vunpack.c.l.b16 %v117
  %v636 = vunpack.c.h.b16 %v117
  %v637 = vunpack.c.l.b16 %v118
  %v638 = vunpack.c.h.b16 %v118
  %v639 = vunpack.c.l.b16 %v119
  %v640 = vunpack.c.h.b16 %v119
  %v641 = vunpack.c.l.b16 %v120
  %v642 = vunpack.c.h.b16 %v120
  %v643 = vunpack.c.l.b16 %v121
  %v644 = vunpack.c.h.b16 %v121
  %v645 = vunpack.c.l.b16 %v122
  %v646 = vunpack.c.h.b16 %v122
  %v647 = vunpack.c.l.b16 %v123
  %v648 = vunpack.c.h.b16 %v123
  %v649 = vunpack.c.l.b16 %v124
  %v650 = vunpack.c.h.b16 %v124
  %v651 = vunpack.c.l.b16 %v125
  %v652 = vunpack.c.h.b16 %v125
  %v653 = vunpack.c.l.b16 %v126
  %v654 = vunpack.c.h.b16 %v126
  %v655 = vunpack.c.l.b16 %v127
  %v656 = vunpack.c.h.b16 %v127
  %v657 = vunpack.c.l.b16 %v128
  %v658 = vunpack.c.h.b16 %v128
  %v659 = vunpack.c.l.b16 %v129
  %v660 = vunpack.c.h.b16 %v129
  %v661 = vunpack.c.l.b16 %v130
  %v662 = vunpack.c.h.b16 %v130
  %v663 = vunpack.c.l.b16 %v131
  %v664 = vunpack.c.h.b16 %v131
  %v665 = vunpack.c.l.b16 %v132
  %v666 = vunpack.c.h.b16 %v132
  %v667 = vunpack.c.l.b16 %v133
  %v668 = vunpack.c.h.b16 %v133
  %v669 = vunpack.c.l.b16 %v134
  %v670 = vunpack.c.h.b16 %v134
  %v671 = vunpack.c.l.b16 %v135
  %v672 = vunpack.c.h.b16 %v135
  %v673 = vunpack.c.l.b16 %v136
  %v674 = vunpack.c.h.b16 %v136
  %v675 = vunpack.c.l.b16 %v137
  %v676 = vunpack.c.h.b16 %v137
  %v677 = vunpack.c.l.b16 %v138
  %v678 = vunpack.c.h.b16 %v138
  %v679 = vunpack.c.l.b16 %v139
  %v680 = vunpack.c.h.b16 %v139
  %v681 = vunpack.c.l.b16 %v140
  %v682 = vunpack.c.h.b16 %v140
  %v683 = vunpack.c.l.b16 %v141
  %v684 = vunpack.c.h.b16 %v141
  %v685 = vunpack.c.l.b16 %v142
  %v686 = vunpack.c.h.b16 %v142
  %v687 = vunpack.c.l.b16 %v143
  %v688 = vunpack.c.h.b16 %v143
  %v689 = vunpack.c.l.b16 %v144
  %v690 = vunpack.c.h.b16 %v144
  %v691 = vunpack.c.l.b16 %v145
  %v692 = vunpack.c.h.b16 %v145
  %v693 = vunpack.c.l.b16 %v146
  %v694 = vunpack.c.h.b16 %v146
  %v695 = vunpack.c.l.b16 %v147
  %v696 = vunpack.c.h.b16 %v147
  %v697 = vunpack.c.l.b16 %v148
  %v698 = vunpack.c.h.b16 %v148
  %v699 = vunpack.c.l.b16 %v149
  %v700 = vunpack.c.h.b16 %v149
  %v701 = vunpack.c.l.b16 %v150
  %v702 = vunpack.c.h.b16 %v150
  %v703 = vunpack.c.l.b16 %v151
  %v704 = vunpack.c.h.b16 %v151
  %v705 = vunpack.c.l.b16 %v152
  %v706 = vunpack.c.h.b16 %v152
  %v707 = vunpack.c.l.b16 %v153
  %v708 = vunpack.c.h.b16 %v153
  %v709 = vunpack.c.l.b16 %v154
  %v710 = vunpack.c.h.b16 %v154
  %v711 = vunpack.c.l.b16 %v155
  %v712 = vunpack.c.h.b16 %v155
  %v713 = vunpack.c.l.b16 %v156
  %v714 = vunpack.c.h.b16 %v156
  %v715 = vunpack.c.l.b16 %v157
  %v716 = vunpack.c.h.b16 %v157
  %v717 = vunpack.c.l.b16 %v158
  %v718 = vunpack.c.h.b16 %v158
  %v719 = vunpack.c.l.b16 %v159
  %v720 = vunpack.c.h.b16 %v159
  %v721 = vunpack.c.l.b16 %v160
  %v722 = vunpack.c.h.b16 %v160
  %v723 = vunpack.c.l.b16 %v161
  %v724 = vunpack.c.h.b16 %v161
  %v725 = vunpack.c.l.b16 %v162
  %v726 = vunpack.c.h.b16 %v162
  %v727 = vunpack.c.l.b16 %v163
  %v728 = vunpack.c.h.b16 %v163
  %v729 = vunpack.c.l.b16 %v164
  %v730 = vunpack.c.h.b16 %v164
  %v731 = vunpack.c.l.b16 %v165
  %v732 = vunpack.c.h.b16 %v165
  %v733 = vunpack.c.l.b16 %v166
  %v734 = vunpack.c.h.b16 %v166
  %v735 = vunpack.c.l.b16 %v167
  %v736 = vunpack.c.h.b16 %v167
  %v737 = vunpack.c.l.b16 %v168
  %v738 = vunpack.c.h.b16 %v168
  %v739 = vunpack.c.l.b16 %v169
  %v740 = vunpack.c.h.b16 %v169
  %v741 = vunpack.c.l.b16 %v170
  %v742 = vunpack.c.h.b16 %v170
  %v743 = vunpack.c.l.b16 %v171
  %v744 = vunpack.c.h.b16 %v171
  %v745 = vunpack.c.l.b16 %v172
  %v746 = vunpack.c.h.b16 %v172
  %v747 = vunpack.c.l.b16 %v173
  %v748 = vunpack.c.h.b16 %v173
  %v749 = vunpack.c.l.b16 %v174
  %v750 = vunpack.c.h.b16 %v174
  %v751 = vunpack.c.l.b16 %v175
  %v752 = vunpack.c.h.b16 %v175
  %v753 = vunpack.c.l.b16 %v176
  %v754 = vunpack.c.h.b16 %v176
  %v755 = vunpack.c.l.b16 %v177
  %v756 = vunpack.c.h.b16 %v177
  %v757 = vunpack.c.l.b16 %v178
  %v758 = vunpack.c.h.b16 %v178
  %v759 = vunpack.c.l.b16 %v179
  %v760 = vunpack.c.h.b16 %v179
  %v761 = vunpack.c.l.b16 %v180
  %v762 = vunpack.c.h.b16 %v180
  %v763 = vunpack.c.l.b16 %v181
  %v764 = vunpack.c.h.b16 %v181
  %v765 = vunpack.c.l.b16 %v182
  %v766 = vunpack.c.h.b16 %v182
  %v767 = vunpack.c.l.b16 %v183
  %v768 = vunpack.c.h.b16 %v183
  %v769 = vunpack.c.l.b16 %v184
  %v770 = vunpack.c.h.b16 %v184
  %v771 = vunpack.c.l.b16 %v185
  %v772 = vunpack.c.h.b16 %v185
  %v773 = vunpack.c.l.b16 %v186
  %v774 = vunpack.c.h.b16 %v186
  %v775 = vunpack.c.l.b16 %v187
  %v776 = vunpack.c.h.b16 %v187
  %v777 = vunpack.c.l.b16 %v188
  %v778 = vunpack.c.h.b16 %v188
  %v779 = vunpack.c.l.b16 %v189
  %v780 = vunpack.c.h.b16 %v189
  %v781 = vunpack.c.l.b16 %v190
  %v782 = vunpack.c.h.b16 %v190
  %v783 = vunpack.c.l.b16 %v191
  %v784 = vunpack.c.h.b16 %v191
  %v785 = vunpack.c.l.b16 %v192
  %v786 = vunpack.c.h.b16 %v192
  %v787 = vunpack.c.l.b16 %v193
  %v788 = vunpack.c.h.b16 %v193
  %v789 = vunpack.c.l.b16 %v194
  %v790 = vunpack.c.h.b16 %v194
  %v791 = vunpack.c.l.b16 %v195
  %v792 = vunpack.c.h.b16 %v195
  %v793 = vunpack.c.l.b16 %v196
  %v794 = vunpack.c.h.b16 %v196
  %v795 = vunpack.c.l.b16 %v197
  %v796 = vunpack.c.h.b16 %v197
  %v797 = vunpack.c.l.b16 %v198
  %v798 = vunpack.c.h.b16 %v198
  %v799 = vunpack.c.l.b16 %v199
  %v800 = vunpack.c.h.b16 %v199
  %v801 = vunpack.c.l.b16 %v200
  %v802 = vunpack.c.h.b16 %v200
  %v803 = vunpack.c.l.b16 %v201
  %v804 = vunpack.c.h.b16 %v201
  %v805 = vunpack.c.l.b16 %v202
  %v806 = vunpack.c.h.b16 %v202
  %v807 = vunpack.c.l.b16 %v203
  %v808 = vunpack.c.h.b16 %v203
  %v809 = vunpack.c.l.b16 %v204
  %v810 = vunpack.c.h.b16 %v204
  %v811 = vunpack.c.l.b16 %v205
  %v812 = vunpack.c.h.b16 %v205
  %v813 = vunpack.c.l.b16 %v206
  %v814 = vunpack.c.h.b16 %v206
  %v815 = vunpack.c.l.b16 %v207
  %v816 = vunpack.c.h.b16 %v207
  %v817 = vunpack.c.l.b16 %v208
  %v818 = vunpack.c.h.b16 %v208
  %v819 = vunpack.c.l.b16 %v209
  %v820 = vunpack.c.h.b16 %v209
  %v821 = vunpack.c.l.b16 %v210
  %v822 = vunpack.c.h.b16 %v210
  %v823 = vunpack.c.l.b16 %v211
  %v824 = vunpack.c.h.b16 %v211
  %v825 = vunpack.c.l.b16 %v212
  %v826 = vunpack.c.h.b16 %v212
  %v827 = vunpack.c.l.b16 %v213
  %v828 = vunpack.c.h.b16 %v213
  %v829 = vunpack.c.l.b16 %v214
  %v830 = vunpack.c.h.b16 %v214
  %v831 = vunpack.c.l.b16 %v215
  %v832 = vunpack.c.h.b16 %v215
  %v833 = vunpack.c.l.b16 %v216
  %v834 = vunpack.c.h.b16 %v216
  %v835 = vunpack.c.l.b16 %v217
  %v836 = vunpack.c.h.b16 %v217
  %v837 = vunpack.c.l.b16 %v218
  %v838 = vunpack.c.h.b16 %v218
  %v839 = vunpack.c.l.b16 %v219
  %v840 = vunpack.c.h.b16 %v219
  %v841 = vunpack.c.l.b16 %v220
  %v842 = vunpack.c.h.b16 %v220
  %v843 = vunpack.c.l.b16 %v221
  %v844 = vunpack.c.h.b16 %v221
  %v845 = vunpack.c.l.b16 %v222
  %v846 = vunpack.c.h.b16 %v222
  %v847 = vunpack.c.l.b16 %v223
  %v848 = vunpack.c.h.b16 %v223
  %v849 = vunpack.c.l.b16 %v224
  %v850 = vunpack.c.h.b16 %v224
  %v851 = vunpack.c.l.b16 %v225
  %v852 = vunpack.c.h.b16 %v225
  %v853 = vunpack.c.l.b16 %v226
  %v854 = vunpack.c.h.b16 %v226
  %v855 = vunpack.c.l.b16 %v227
  %v856 = vunpack.c.h.b16 %v227
  %v857 = vunpack.c.l.b16 %v228
  %v858 = vunpack.c.h.b16 %v228
  %v859 = vunpack.c.l.b16 %v229
  %v860 = vunpack.c.h.b16 %v229
  %v861 = vunpack.c.l.b16 %v230
  %v862 = vunpack.c.h.b16 %v230
  %v863 = vunpack.c.l.b16 %v231
  %v864 = vunpack.c.h.b16 %v231
  %v865 = vunpack.c.l.b16 %v232
  %v866 = vunpack.c.h.b16 %v232
  %v867 = vpack.c.b16 %v479, %v475
  %v868 = vpack.c.b16 %v480, %v476
  %v869 = vpack.c.b16 %v481, %v477
  %v870 = vpack.c.b16 %v482, %v478
  %v871 = vpack.c.b16 %v487, %v483
  %v872 = vpack.c.b16 %v488, %v484
  %v873 = vpack.c.b16 %v489, %v485
  %v874 = vpack.c.b16 %v490, %v486
  %v875 = vpack.c.b16 %v495, %v491
  %v876 = vpack.c.b16 %v496, %v492
  %v877 = vpack.c.b16 %v497, %v493
  %v878 = vpack.c.b16 %v498, %v494
  %v879 = vpack.c.b16 %v503, %v499
  %v880 = vpack.c.b16 %v504, %v500
  %v881 = vpack.c.b16 %v505, %v501
  %v882 = vpack.c.b16 %v506, %v502
  %v883 = vpack.c.b16 %v511, %v507
  %v884 = vpack.c.b16 %v512, %v508
  %v885 = vpack.c.b16 %v513, %v509
  %v886 = vpack.c.b16 %v514, %v510
  %v887 = vpack.c.b16 %v519, %v515
  %v888 = vpack.c.b16 %v520, %v516
  %v889 = vpack.c.b16 %v521, %v517
  %v890 = vpack.c.b16 %v522, %v518
  %v891 = vpack.c.b16 %v527, %v523
  %v892 = vpack.c.b16 %v528, %v524
  %v893 = vpack.c.b16 %v529, %v525
  %v894 = vpack.c.b16 %v530, %v526
  %v895 = vpack.c.b16 %v535, %v531
  %v896 = vpack.c.b16 %v536, %v532
  %v897 = vpack.c.b16 %v537, %v533
  %v898 = vpack.c.b16 %v538, %v534
  %v899 = vpack.c.b16 %v543, %v539
  %v900 = vpack.c.b16 %v544, %v540
  %v901 = vpack.c.b16 %v545, %v541
  %v902 = vpack.c.b16 %v546, %v542
  %v903 = vpack.c.b16 %v551, %v547
  %v904 = vpack.c.b16 %v552, %v548
  %v905 = vpack.c.b16 %v553, %v549
  %v906 = vpack.c.b16 %v554, %v550
  %v907 = vpack.c.b16 %v559, %v555
  %v908 = vpack.c.b16 %v560, %v556
  %v909 = vpack.c.b16 %v561, %v557
  %v910 = vpack.c.b16 %v562, %v558
  %v911 = vpack.c.b16 %v567, %v563
  %v912 = vpack.c.b16 %v568, %v564
  %v913 = vpack.c.b16 %v569, %v565
  %v914 = vpack.c.b16 %v570, %v566
  %v915 = vpack.c.b16 %v575, %v571
  %v916 = vpack.c.b16 %v576, %v572
  %v917 = vpack.c.b16 %v577, %v573
  %v918 = vpack.c.b16 %v578, %v574
  %v919 = vpack.c.b16 %v583, %v579
  %v920 = vpack.c.b16 %v584, %v580
  %v921 = vpack.c.b16 %v585, %v581
  %v922 = vpack.c.b16 %v586, %v582
  %v923 = vpack.c.b16 %v591, %v587
  %v924 = vpack.c.b16 %v592, %v588
  %v925 = vpack.c.b16 %v593, %v589
  %v926 = vpack.c.b16 %v594, %v590
  %v927 = vpack.c.b16 %v599, %v595
  %v928 = vpack.c.b16 %v600, %v596
  %v929 = vpack.c.b16 %v601, %v597
  %v930 = vpack.c.b16 %v602, %v598
  %v931 = vpack.c.b16 %v607, %v603
  %v932 = vpack.c.b16 %v608, %v604
  %v933 = vpack.c.b16 %v609, %v605
  %v934 = vpack.c.b16 %v610, %v606
  %v935 = vpack.c.b16 %v615, %v611
  %v936 = vpack.c.b16 %v616, %v612
  %v937 = vpack.c.b16 %v617, %v613
  %v938 = vpack.c.b16 %v618, %v614
  %v939 = vpack.c.b16 %v623, %v619
  %v940 = vpack.c.b16 %v624, %v620
  %v941 = vpack.c.b16 %v625, %v621
  %v942 = vpack.c.b16 %v626, %v622
  %v943 = vpack.c.b16 %v631, %v627
  %v944 = vpack.c.b16 %v632, %v628
  %v945 = vpack.c.b16 %v633, %v629
  %v946 = vpack.c.b16 %v634, %v630
  %v947 = vpack.c.b16 %v639, %v635
  %v948 = vpack.c.b16 %v640, %v636
  %v949 = vpack.c.b16 %v641, %v637
  %v950 = vpack.c.b16 %v642, %v638
  %v951 = vpack.c.b16 %v647, %v643
  %v952 = vpack.c.b16 %v648, %v644
  %v953 = vpack.c.b16 %v649, %v645
  %v954 = vpack.c.b16 %v650, %v646
  %v955 = vpack.c.b16 %v655, %v651
  %v956 = vpack.c.b16 %v656, %v652
  %v957 = vpack.c.b16 %v657, %v653
  %v958 = vpack.c.b16 %v658, %v654
  %v959 = vpack.c.b16 %v663, %v659
  %v960 = vpack.c.b16 %v664, %v660
  %v961 = vpack.c.b16 %v665, %v661
  %v962 = vpack.c.b16 %v666, %v662
  %v963 = vpack.c.b16 %v671, %v667
  %v964 = vpack.c.b16 %v672, %v668
  %v965 = vpack.c.b16 %v673, %v669
  %v966 = vpack.c.b16 %v674, %v670
  %v967 = vpack.c.b16 %v679, %v675
  %v968 = vpack.c.b16 %v680, %v676
  %v969 = vpack.c.b16 %v681, %v677
  %v970 = vpack.c.b16 %v682, %v678
  %v971 = vpack.c.b16 %v687, %v683
  %v972 = vpack.c.b16 %v688, %v684
  %v973 = vpack.c.b16 %v689, %v685
  %v974 = vpack.c.b16 %v690, %v686
  %v975 = vpack.c.b16 %v695, %v691
  %v976 = vpack.c.b16 %v696, %v692
  %v977 = vpack.c.b16 %v697, %v693
  %v978 = vpack.c.b16 %v698, %v694
  %v979 = vpack.c.b16 %v703, %v699
  %v980 = vpack.c.b16 %v704, %v700
  %v981 = vpack.c.b16 %v705, %v701
  %v982 = vpack.c.b16 %v706, %v702
  %v983 = vpack.c.b16 %v711, %v707
  %v984 = vpack.c.b16 %v712, %v708
  %v985 = vpack.c.b16 %v713, %v709
  %v986 = vpack.c.b16 %v714, %v710
  %v987 = vpack.c.b16 %v719, %v715
  %v988 = vpack.c.b16 %v720, %v716
  %v989 = vpack.c.b16 %v721, %v717
  %v990 = vpack.c.b16 %v722, %v718
  %v991 = vpack.c.b16 %v727, %v723
  %v992 = vpack.c.b16 %v728, %v724
  %v993 = vpack.c.b16 %v729, %v725
  %v994 = vpack.c.b16 %v730, %v726
  %v995 = vpack.c.b16 %v735, %v731
  %v996 = vpack.c.b16 %v736, %v732
  %v997 = vpack.c.b16 %v737, %v733
  %v998 = vpack.c.b16 %v738, %v734
  %v999 = vpack.c.b16 %v743, %v739
  %v1000 = vpack.c.b16 %v744, %v740
  %v1001 = vpack.c.b16 %v745, %v741
  %v1002 = vpack.c.b16 %v746, %v742
  %v1003 = vpack.c.b16 %v751, %v747
  %v1004 = vpack.c.b16 %v752, %v748
  %v1005 = vpack.c.b16 %v753, %v749
  %v1006 = vpack.c.b16 %v754, %v750
  %v1007 = vpack.c.b16 %v759, %v755
  %v1008 = vpack.c.b16 %v760, %v756
  %v1009 = vpack.c.b16 %v761, %v757
  %v1010 = vpack.c.b16 %v762, %v758
  %v1011 = vpack.c.b16 %v767, %v763
  %v1012 = vpack.c.b16 %v768, %v764
  %v1013 = vpack.c.b16 %v769, %v765
  %v1014 = vpack.c.b16 %v770, %v766
  %v1015 = vpack.c.b16 %v775, %v771
  %v1016 = vpack.c.b16 %v776, %v772
  %v1017 = vpack.c.b16 %v777, %v773
  %v1018 = vpack.c.b16 %v778, %v774
  %v1019 = vpack.c.b16 %v783, %v779
  %v1020 = vpack.c.b16 %v784, %v780
  %v1021 = vpack.c.b16 %v785, %v781
  %v1022 = vpack.c.b16 %v786, %v782
  %v1023 = vpack.c.b16 %v791, %v787
  %v1024 = vpack.c.b16 %v792, %v788
  %v1025 = vpack.c.b16 %v793, %v789
  %v1026 = vpack.c.b16 %v794, %v790
  %v1027 = vpack.c.b16 %v799, %v795
  %v1028 = vpack.c.b16 %v800, %v796
  %v1029 = vpack.c.b16 %v801, %v797
  %v1030 = vpack.c.b16 %v802, %v798
  %v1031 = vpack.c.b16 %v807, %v803
  %v1032 = vpack.c.b16 %v808, %v804
  %v1033 = vpack.c.b16 %v809, %v805
  %v1034 = vpack.c.b16 %v810, %v806
  %v1035 = vpack.c.b16 %v815, %v811
  %v1036 = vpack.c.b16 %v816, %v812
  %v1037 = vpack.c.b16 %v817, %v813
  %v1038 = vpack.c.b16 %v818, %v814
  %v1039 = vpack.c.b16 %v823, %v819
  %v1040 = vpack.c.b16 %v824, %v820
  %v1041 = vpack.c.b16 %v825, %v821
  %v1042 = vpack.c.b16 %v826, %v822
  %v1043 = vpack.c.b16 %v831, %v827
  %v1044 = vpack.c.b16 %v832, %v828
  %v1045 = vpack.c.b16 %v833, %v829
  %v1046 = vpack.c.b16 %v834, %v830
  %v1047 = vpack.c.b16 %v839, %v835
  %v1048 = vpack.c.b16 %v840, %v836
  %v1049 = vpack.c.b16 %v841, %v837
  %v1050 = vpack.c.b16 %v842, %v838
  %v1051 = vpack.c.b16 %v847, %v843
  %v1052 = vpack.c.b16 %v848, %v844
  %v1053 = vpack.c.b16 %v849, %v845
  %v1054 = vpack.c.b16 %v850, %v846
  %v1055 = vpack.c.b16 %v855, %v851
  %v1056 = vpack.c.b16 %v856, %v852
  %v1057 = vpack.c.b16 %v857, %v853
  %v1058 = vpack.c.b16 %v858, %v854
  %v1059 = vpack.c.b16 %v863, %v859
  %v1060 = vpack.c.b16 %v864, %v860
  %v1061 = vpack.c.b16 %v865, %v861
  %v1062 = vpack.c.b16 %v866, %v862
  %vm1259 = vcmask 130048
  %v1261 = vsel %vm1259, %v272, 0
  %1263 = vmatprep.subr.bf16.mxu0 %v896
  %1264 = vmatpush1.bf16.msra.mxu0 %v895
  %1265 = vmatprep.subr.bf16.mxu0 %v892
  %1266 = vmatpush1.bf16.msra.mxu0 %v891
  %1267 = vmatprep.subr.bf16.mxu0 %v888
  %1268 = vmatpush1.bf16.msra.mxu0 %v887
  %1269 = vmatprep.subr.bf16.mxu0 %v884
  %1270 = vmatpush1.bf16.msra.mxu0 %v883
  %1271 = vmatprep.subr.bf16.mxu0 %v880
  %1272 = vmatpush1.bf16.msra.mxu0 %v879
  %1273 = vmatprep.subr.bf16.mxu0 %v876
  %1274 = vmatpush1.bf16.msra.mxu0 %v875
  %1275 = vmatprep.subr.bf16.mxu0 %v872
  %1276 = vmatpush1.bf16.msra.mxu0 %v871
  %1277 = vmatprep.subr.bf16.mxu0 %v868
  %1278 = vmatpush1.bf16.msra.mxu0 %v867
  %1279 = vmatprep.subr.bf16.mxu0 %v928
  %1280 = vmatpush2.bf16.msra.mxu0 %v927
  %1281 = vmatprep.subr.bf16.mxu0 %v924
  %1282 = vmatpush2.bf16.msra.mxu0 %v923
  %1283 = vmatprep.subr.bf16.mxu0 %v920
  %1284 = vmatpush2.bf16.msra.mxu0 %v919
  %1285 = vmatprep.subr.bf16.mxu0 %v916
  %1286 = vmatpush2.bf16.msra.mxu0 %v915
  %1287 = vmatprep.subr.bf16.mxu0 %v912
  %1288 = vmatpush2.bf16.msra.mxu0 %v911
  %1289 = vmatprep.subr.bf16.mxu0 %v908
  %1290 = vmatpush2.bf16.msra.mxu0 %v907
  %1291 = vmatprep.subr.bf16.mxu0 %v904
  %1292 = vmatpush2.bf16.msra.mxu0 %v903
  %1293 = vmatprep.subr.bf16.mxu0 %v900
  %1294 = vmatpush2.bf16.msra.mxu0 %v899
  %1295 = vmatprep.mubr.bf16.mxu0 %v267
  %1296 = vmatmul.mubr.bf16.gmra.mxu0 %v266
  %v1297 = vpop.f32.mrf.mxu0
  %v1298 = vadd.f32 %v238, %v1297
  %v1299 = vpop.f32.mrf.mxu0
  %v1300 = vadd.f32 %v242, %v1299
  %v1301 = vpop.f32.mrf.mxu0
  %v1302 = vpop.f32.mrf.mxu0
  %1303 = vdwg.mxu0
  %1304 = vmatprep.subr.bf16.mxu0 %v960
  %1305 = vmatpush1.bf16.msra.mxu0 %v959
  %1306 = vmatprep.subr.bf16.mxu0 %v956
  %1307 = vmatpush1.bf16.msra.mxu0 %v955
  %1308 = vmatprep.subr.bf16.mxu0 %v952
  %1309 = vmatpush1.bf16.msra.mxu0 %v951
  %1310 = vmatprep.subr.bf16.mxu0 %v948
  %1311 = vmatpush1.bf16.msra.mxu0 %v947
  %1312 = vmatprep.subr.bf16.mxu0 %v944
  %1313 = vmatpush1.bf16.msra.mxu0 %v943
  %1314 = vmatprep.subr.bf16.mxu0 %v940
  %1315 = vmatpush1.bf16.msra.mxu0 %v939
  %1316 = vmatprep.subr.bf16.mxu0 %v936
  %1317 = vmatpush1.bf16.msra.mxu0 %v935
  %1318 = vmatprep.subr.bf16.mxu0 %v932
  %1319 = vmatpush1.bf16.msra.mxu0 %v931
  %1320 = vmatprep.subr.bf16.mxu0 %v992
  %1321 = vmatpush2.bf16.msra.mxu0 %v991
  %1322 = vmatprep.subr.bf16.mxu0 %v988
  %1323 = vmatpush2.bf16.msra.mxu0 %v987
  %1324 = vmatprep.subr.bf16.mxu0 %v984
  %1325 = vmatpush2.bf16.msra.mxu0 %v983
  %1326 = vmatprep.subr.bf16.mxu0 %v980
  %1327 = vmatpush2.bf16.msra.mxu0 %v979
  %1328 = vmatprep.subr.bf16.mxu0 %v976
  %1329 = vmatpush2.bf16.msra.mxu0 %v975
  %1330 = vmatprep.subr.bf16.mxu0 %v972
  %1331 = vmatpush2.bf16.msra.mxu0 %v971
  %1332 = vmatprep.subr.bf16.mxu0 %v968
  %1333 = vmatpush2.bf16.msra.mxu0 %v967
  %1334 = vmatprep.subr.bf16.mxu0 %v964
  %1335 = vmatpush2.bf16.msra.mxu0 %v963
  %1336 = vmatprep.mubr.bf16.mxu0 %v269
  %1337 = vmatmul.mubr.bf16.gmra.mxu0 %v268
  %v1338 = vpop.f32.mrf.mxu0
  %v1339 = vadd.f32 %v1298, %v1338
  %v1340 = vpop.f32.mrf.mxu0
  %v1341 = vadd.f32 %v1300, %v1340
  %v1342 = vpop.f32.mrf.mxu0
  %v1343 = vpop.f32.mrf.mxu0
  %1344 = vdwg.mxu0
  %1345 = vmatprep.subr.bf16.mxu0 %v1024
  %1346 = vmatpush1.bf16.msra.mxu0 %v1023
  %1347 = vmatprep.subr.bf16.mxu0 %v1020
  %1348 = vmatpush1.bf16.msra.mxu0 %v1019
  %1349 = vmatprep.subr.bf16.mxu0 %v1016
  %1350 = vmatpush1.bf16.msra.mxu0 %v1015
  %1351 = vmatprep.subr.bf16.mxu0 %v1012
  %1352 = vmatpush1.bf16.msra.mxu0 %v1011
  %1353 = vmatprep.subr.bf16.mxu0 %v1008
  %1354 = vmatpush1.bf16.msra.mxu0 %v1007
  %1355 = vmatprep.subr.bf16.mxu0 %v1004
  %1356 = vmatpush1.bf16.msra.mxu0 %v1003
  %1357 = vmatprep.subr.bf16.mxu0 %v1000
  %1358 = vmatpush1.bf16.msra.mxu0 %v999
  %1359 = vmatprep.subr.bf16.mxu0 %v996
  %1360 = vmatpush1.bf16.msra.mxu0 %v995
  %1361 = vmatprep.subr.bf16.mxu0 %v1056
  %1362 = vmatpush2.bf16.msra.mxu0 %v1055
  %1363 = vmatprep.subr.bf16.mxu0 %v1052
  %1364 = vmatpush2.bf16.msra.mxu0 %v1051
  %1365 = vmatprep.subr.bf16.mxu0 %v1048
  %1366 = vmatpush2.bf16.msra.mxu0 %v1047
  %1367 = vmatprep.subr.bf16.mxu0 %v1044
  %1368 = vmatpush2.bf16.msra.mxu0 %v1043
  %1369 = vmatprep.subr.bf16.mxu0 %v1040
  %1370 = vmatpush2.bf16.msra.mxu0 %v1039
  %1371 = vmatprep.subr.bf16.mxu0 %v1036
  %1372 = vmatpush2.bf16.msra.mxu0 %v1035
  %1373 = vmatprep.subr.bf16.mxu0 %v1032
  %1374 = vmatpush2.bf16.msra.mxu0 %v1031
  %1375 = vmatprep.subr.bf16.mxu0 %v1028
  %1376 = vmatpush2.bf16.msra.mxu0 %v1027
  %1377 = vmatprep.mubr.bf16.mxu0 %v271
  %1378 = vmatmul.mubr.bf16.gmra.mxu0 %v270
  %v1379 = vpop.f32.mrf.mxu0
  %v1380 = vadd.f32 %v1339, %v1379
  %v1381 = vpop.f32.mrf.mxu0
  %v1382 = vadd.f32 %v1341, %v1381
  %v1383 = vpop.f32.mrf.mxu0
  %v1384 = vpop.f32.mrf.mxu0
  %1385 = vdwg.mxu0
  %1386 = vmatprep.subr.bf16.mxu0 0
  %1387 = vmatpush1.bf16.msra.mxu0 0
  %1388 = vmatprep.subr.bf16.mxu0 0
  %1389 = vmatpush1.bf16.msra.mxu0 0
  %1390 = vmatprep.subr.bf16.mxu0 0
  %1391 = vmatpush1.bf16.msra.mxu0 0
  %1392 = vmatprep.subr.bf16.mxu0 0
  %1393 = vmatpush1.bf16.msra.mxu0 0
  %1394 = vmatprep.subr.bf16.mxu0 0
  %1395 = vmatpush1.bf16.msra.mxu0 0
  %1396 = vmatprep.subr.bf16.mxu0 0
  %1397 = vmatpush1.bf16.msra.mxu0 0
  %1398 = vmatprep.subr.bf16.mxu0 0
  %1399 = vmatpush1.bf16.msra.mxu0 0
  %1400 = vmatprep.subr.bf16.mxu0 %v1060
  %1401 = vmatpush1.bf16.msra.mxu0 %v1059
  %1402 = vmatprep.subr.bf16.mxu0 0
  %1403 = vmatpush2.bf16.msra.mxu0 0
  %1404 = vmatprep.subr.bf16.mxu0 0
  %1405 = vmatpush2.bf16.msra.mxu0 0
  %1406 = vmatprep.subr.bf16.mxu0 0
  %1407 = vmatpush2.bf16.msra.mxu0 0
  %1408 = vmatprep.subr.bf16.mxu0 0
  %1409 = vmatpush2.bf16.msra.mxu0 0
  %1410 = vmatprep.subr.bf16.mxu0 0
  %1411 = vmatpush2.bf16.msra.mxu0 0
  %1412 = vmatprep.subr.bf16.mxu0 0
  %1413 = vmatpush2.bf16.msra.mxu0 0
  %1414 = vmatprep.subr.bf16.mxu0 0
  %1415 = vmatpush2.bf16.msra.mxu0 0
  %1416 = vmatprep.subr.bf16.mxu0 0
  %1417 = vmatpush2.bf16.msra.mxu0 0
  %1418 = vmatprep.mubr.bf16.mxu0 0
  %1419 = vmatmul.mubr.bf16.gmra.mxu0 %v1261
  %v1420 = vpop.f32.mrf.mxu0
  %v1421 = vadd.f32 %v1380, %v1420
  %v1422 = vpop.f32.mrf.mxu0
  %v1423 = vadd.f32 %v1382, %v1422
  %v1424 = vpop.f32.mrf.mxu0
  %v1425 = vpop.f32.mrf.mxu0
  %1426 = vdwg.mxu0
  %1427 = vmatprep.subr.bf16.mxu0 %v898
  %1428 = vmatpush1.bf16.msra.mxu0 %v897
  %1429 = vmatprep.subr.bf16.mxu0 %v894
  %1430 = vmatpush1.bf16.msra.mxu0 %v893
  %1431 = vmatprep.subr.bf16.mxu0 %v890
  %1432 = vmatpush1.bf16.msra.mxu0 %v889
  %1433 = vmatprep.subr.bf16.mxu0 %v886
  %1434 = vmatpush1.bf16.msra.mxu0 %v885
  %1435 = vmatprep.subr.bf16.mxu0 %v882
  %1436 = vmatpush1.bf16.msra.mxu0 %v881
  %1437 = vmatprep.subr.bf16.mxu0 %v878
  %1438 = vmatpush1.bf16.msra.mxu0 %v877
  %1439 = vmatprep.subr.bf16.mxu0 %v874
  %1440 = vmatpush1.bf16.msra.mxu0 %v873
  %1441 = vmatprep.subr.bf16.mxu0 %v870
  %1442 = vmatpush1.bf16.msra.mxu0 %v869
  %1443 = vmatprep.subr.bf16.mxu0 %v930
  %1444 = vmatpush2.bf16.msra.mxu0 %v929
  %1445 = vmatprep.subr.bf16.mxu0 %v926
  %1446 = vmatpush2.bf16.msra.mxu0 %v925
  %1447 = vmatprep.subr.bf16.mxu0 %v922
  %1448 = vmatpush2.bf16.msra.mxu0 %v921
  %1449 = vmatprep.subr.bf16.mxu0 %v918
  %1450 = vmatpush2.bf16.msra.mxu0 %v917
  %1451 = vmatprep.subr.bf16.mxu0 %v914
  %1452 = vmatpush2.bf16.msra.mxu0 %v913
  %1453 = vmatprep.subr.bf16.mxu0 %v910
  %1454 = vmatpush2.bf16.msra.mxu0 %v909
  %1455 = vmatprep.subr.bf16.mxu0 %v906
  %1456 = vmatpush2.bf16.msra.mxu0 %v905
  %1457 = vmatprep.subr.bf16.mxu0 %v902
  %1458 = vmatpush2.bf16.msra.mxu0 %v901
  %1459 = vmatprep.mubr.bf16.mxu0 %v267
  %1460 = vmatmul.mubr.bf16.gmra.mxu0 %v266
  %v1461 = vpop.f32.mrf.mxu0
  %v1462 = vadd.f32 %v246, %v1461
  %v1463 = vpop.f32.mrf.mxu0
  %v1464 = vadd.f32 %v250, %v1463
  %v1465 = vpop.f32.mrf.mxu0
  %v1466 = vpop.f32.mrf.mxu0
  %1467 = vdwg.mxu0
  %1468 = vmatprep.subr.bf16.mxu0 %v962
  %1469 = vmatpush1.bf16.msra.mxu0 %v961
  %1470 = vmatprep.subr.bf16.mxu0 %v958
  %1471 = vmatpush1.bf16.msra.mxu0 %v957
  %1472 = vmatprep.subr.bf16.mxu0 %v954
  %1473 = vmatpush1.bf16.msra.mxu0 %v953
  %1474 = vmatprep.subr.bf16.mxu0 %v950
  %1475 = vmatpush1.bf16.msra.mxu0 %v949
  %1476 = vmatprep.subr.bf16.mxu0 %v946
  %1477 = vmatpush1.bf16.msra.mxu0 %v945
  %1478 = vmatprep.subr.bf16.mxu0 %v942
  %1479 = vmatpush1.bf16.msra.mxu0 %v941
  %1480 = vmatprep.subr.bf16.mxu0 %v938
  %1481 = vmatpush1.bf16.msra.mxu0 %v937
  %1482 = vmatprep.subr.bf16.mxu0 %v934
  %1483 = vmatpush1.bf16.msra.mxu0 %v933
  %1484 = vmatprep.subr.bf16.mxu0 %v994
  %1485 = vmatpush2.bf16.msra.mxu0 %v993
  %1486 = vmatprep.subr.bf16.mxu0 %v990
  %1487 = vmatpush2.bf16.msra.mxu0 %v989
  %1488 = vmatprep.subr.bf16.mxu0 %v986
  %1489 = vmatpush2.bf16.msra.mxu0 %v985
  %1490 = vmatprep.subr.bf16.mxu0 %v982
  %1491 = vmatpush2.bf16.msra.mxu0 %v981
  %1492 = vmatprep.subr.bf16.mxu0 %v978
  %1493 = vmatpush2.bf16.msra.mxu0 %v977
  %1494 = vmatprep.subr.bf16.mxu0 %v974
  %1495 = vmatpush2.bf16.msra.mxu0 %v973
  %1496 = vmatprep.subr.bf16.mxu0 %v970
  %1497 = vmatpush2.bf16.msra.mxu0 %v969
  %1498 = vmatprep.subr.bf16.mxu0 %v966
  %1499 = vmatpush2.bf16.msra.mxu0 %v965
  %1500 = vmatprep.mubr.bf16.mxu0 %v269
  %1501 = vmatmul.mubr.bf16.gmra.mxu0 %v268
  %v1502 = vpop.f32.mrf.mxu0
  %v1503 = vadd.f32 %v1462, %v1502
  %v1504 = vpop.f32.mrf.mxu0
  %v1505 = vadd.f32 %v1464, %v1504
  %v1506 = vpop.f32.mrf.mxu0
  %v1507 = vpop.f32.mrf.mxu0
  %1508 = vdwg.mxu0
  %1509 = vmatprep.subr.bf16.mxu0 %v1026
  %1510 = vmatpush1.bf16.msra.mxu0 %v1025
  %1511 = vmatprep.subr.bf16.mxu0 %v1022
  %1512 = vmatpush1.bf16.msra.mxu0 %v1021
  %1513 = vmatprep.subr.bf16.mxu0 %v1018
  %1514 = vmatpush1.bf16.msra.mxu0 %v1017
  %1515 = vmatprep.subr.bf16.mxu0 %v1014
  %1516 = vmatpush1.bf16.msra.mxu0 %v1013
  %1517 = vmatprep.subr.bf16.mxu0 %v1010
  %1518 = vmatpush1.bf16.msra.mxu0 %v1009
  %1519 = vmatprep.subr.bf16.mxu0 %v1006
  %1520 = vmatpush1.bf16.msra.mxu0 %v1005
  %1521 = vmatprep.subr.bf16.mxu0 %v1002
  %1522 = vmatpush1.bf16.msra.mxu0 %v1001
  %1523 = vmatprep.subr.bf16.mxu0 %v998
  %1524 = vmatpush1.bf16.msra.mxu0 %v997
  %1525 = vmatprep.subr.bf16.mxu0 %v1058
  %1526 = vmatpush2.bf16.msra.mxu0 %v1057
  %1527 = vmatprep.subr.bf16.mxu0 %v1054
  %1528 = vmatpush2.bf16.msra.mxu0 %v1053
  %1529 = vmatprep.subr.bf16.mxu0 %v1050
  %1530 = vmatpush2.bf16.msra.mxu0 %v1049
  %1531 = vmatprep.subr.bf16.mxu0 %v1046
  %1532 = vmatpush2.bf16.msra.mxu0 %v1045
  %1533 = vmatprep.subr.bf16.mxu0 %v1042
  %1534 = vmatpush2.bf16.msra.mxu0 %v1041
  %1535 = vmatprep.subr.bf16.mxu0 %v1038
  %1536 = vmatpush2.bf16.msra.mxu0 %v1037
  %1537 = vmatprep.subr.bf16.mxu0 %v1034
  %1538 = vmatpush2.bf16.msra.mxu0 %v1033
  %1539 = vmatprep.subr.bf16.mxu0 %v1030
  %1540 = vmatpush2.bf16.msra.mxu0 %v1029
  %1541 = vmatprep.mubr.bf16.mxu0 %v271
  %1542 = vmatmul.mubr.bf16.gmra.mxu0 %v270
  %v1543 = vpop.f32.mrf.mxu0
  %v1544 = vadd.f32 %v1503, %v1543
  %v1545 = vpop.f32.mrf.mxu0
  %v1546 = vadd.f32 %v1505, %v1545
  %v1547 = vpop.f32.mrf.mxu0
  %v1548 = vpop.f32.mrf.mxu0
  %1549 = vdwg.mxu0
  %1550 = vmatprep.subr.bf16.mxu0 0
  %1551 = vmatpush1.bf16.msra.mxu0 0
  %1552 = vmatprep.subr.bf16.mxu0 0
  %1553 = vmatpush1.bf16.msra.mxu0 0
  %1554 = vmatprep.subr.bf16.mxu0 0
  %1555 = vmatpush1.bf16.msra.mxu0 0
  %1556 = vmatprep.subr.bf16.mxu0 0
  %1557 = vmatpush1.bf16.msra.mxu0 0
  %1558 = vmatprep.subr.bf16.mxu0 0
  %1559 = vmatpush1.bf16.msra.mxu0 0
  %1560 = vmatprep.subr.bf16.mxu0 0
  %1561 = vmatpush1.bf16.msra.mxu0 0
  %1562 = vmatprep.subr.bf16.mxu0 0
  %1563 = vmatpush1.bf16.msra.mxu0 0
  %1564 = vmatprep.subr.bf16.mxu0 %v1062
  %1565 = vmatpush1.bf16.msra.mxu0 %v1061
  %1566 = vmatprep.subr.bf16.mxu0 0
  %1567 = vmatpush2.bf16.msra.mxu0 0
  %1568 = vmatprep.subr.bf16.mxu0 0
  %1569 = vmatpush2.bf16.msra.mxu0 0
  %1570 = vmatprep.subr.bf16.mxu0 0
  %1571 = vmatpush2.bf16.msra.mxu0 0
  %1572 = vmatprep.subr.bf16.mxu0 0
  %1573 = vmatpush2.bf16.msra.mxu0 0
  %1574 = vmatprep.subr.bf16.mxu0 0
  %1575 = vmatpush2.bf16.msra.mxu0 0
  %1576 = vmatprep.subr.bf16.mxu0 0
  %1577 = vmatpush2.bf16.msra.mxu0 0
  %1578 = vmatprep.subr.bf16.mxu0 0
  %1579 = vmatpush2.bf16.msra.mxu0 0
  %1580 = vmatprep.subr.bf16.mxu0 0
  %1581 = vmatpush2.bf16.msra.mxu0 0
  %1582 = vmatprep.mubr.bf16.mxu0 0
  %1583 = vmatmul.mubr.bf16.gmra.mxu0 %v1261
  %v1584 = vpop.f32.mrf.mxu0
  %v1585 = vadd.f32 %v1544, %v1584
  %v1586 = vpop.f32.mrf.mxu0
  %v1587 = vadd.f32 %v1546, %v1586
  %v1588 = vpop.f32.mrf.mxu0
  %v1589 = vpop.f32.mrf.mxu0
  %1590 = vdwg.mxu0
  %v1591 = vmax.f32 %v1421, 0.0
  %v1592 = vmax.f32 %v1423, 0.0
  %v1593 = vmax.f32 %v1585, 0.0
  %v1594 = vmax.f32 %v1587, 0.0
  %v1595 = vpack.c.bf16 %v1591, %v1591
  %v1596 = vpack.c.bf16 %v1592, %v1592
  %v1597 = vpack.c.bf16 %v1593, %v1593
  %v1598 = vpack.c.bf16 %v1594, %v1594
  %v1599 = vld [vmem:[%s3] sm:$0xff]
  %v1600 = vld [vmem:[%s3 + $0x8] sm:$0xff]
  %v1601 = vld [vmem:[%s3 + $0x10] sm:$0xff]
  %v1602 = vld [vmem:[%s3 + $0x18] sm:$0xff]
  %v1603 = vld [vmem:[%s3 + $0x20] sm:$0xff]
  %v1604 = vld [vmem:[%s3 + $0x28] sm:$0xff]
  %v1605 = vld [vmem:[%s3 + $0x30] sm:$0xff]
  %v1606 = vld [vmem:[%s3 + $0x38] sm:$0xff]
  %v1607 = vld [vmem:[%s3 + $0x40] sm:$0xff]
  %v1608 = vld [vmem:[%s3 + $0x48] sm:$0xff]
  %v1609 = vld [vmem:[%s3 + $0x50] sm:$0xff]
  %v1610 = vld [vmem:[%s3 + $0x58] sm:$0xff]
  %v1611 = vld [vmem:[%s3 + $0x60] sm:$0xff]
  %v1612 = vld [vmem:[%s3 + $0x68] sm:$0xff]
  %v1613 = vld [vmem:[%s3 + $0x70] sm:$0xff]
  %v1614 = vld [vmem:[%s3 + $0x78] sm:$0xff]
  %v1615 = vld [vmem:[%s3 + $0x80] sm:$0xff]
  %v1616 = vld [vmem:[%s3 + $0x88] sm:$0xff]
  %v1617 = vld [vmem:[%s3 + $0x90] sm:$0xff]
  %v1618 = vld [vmem:[%s3 + $0x98] sm:$0xff]
  %v1619 = vld [vmem:[%s3 + $0xa0] sm:$0xff]
  %v1620 = vld [vmem:[%s3 + $0xa8] sm:$0xff]
  %v1621 = vld [vmem:[%s3 + $0xb0] sm:$0xff]
  %v1622 = vld [vmem:[%s3 + $0xb8] sm:$0xff]
  %v1623 = vld [vmem:[%s3 + $0xc0] sm:$0xff]
  %v1624 = vld [vmem:[%s3 + $0xc8] sm:$0xff]
  %v1625 = vld [vmem:[%s3 + $0xd0] sm:$0xff]
  %v1626 = vld [vmem:[%s3 + $0xd8] sm:$0xff]
  %v1627 = vld [vmem:[%s3 + $0xe0] sm:$0xff]
  %v1628 = vld [vmem:[%s3 + $0xe8] sm:$0xff]
  %v1629 = vld [vmem:[%s3 + $0xf0] sm:$0xff]
  %v1630 = vld [vmem:[%s3 + $0xf8] sm:$0xff]
  %v1631 = vld [vmem:[%s3 + $0x100] sm:$0xff]
  %v1632 = vld [vmem:[%s3 + $0x108] sm:$0xff]
  %v1633 = vld [vmem:[%s3 + $0x110] sm:$0xff]
  %v1634 = vld [vmem:[%s3 + $0x118] sm:$0xff]
  %v1635 = vld [vmem:[%s3 + $0x120] sm:$0xff]
  %v1636 = vld [vmem:[%s3 + $0x128] sm:$0xff]
  %v1637 = vld [vmem:[%s3 + $0x130] sm:$0xff]
  %v1638 = vld [vmem:[%s3 + $0x138] sm:$0xff]
  %v1639 = vld [vmem:[%s3 + $0x140] sm:$0xff]
  %v1640 = vld [vmem:[%s3 + $0x148] sm:$0xff]
  %v1641 = vld [vmem:[%s3 + $0x150] sm:$0xff]
  %v1642 = vld [vmem:[%s3 + $0x158] sm:$0xff]
  %v1643 = vld [vmem:[%s3 + $0x160] sm:$0xff]
  %v1644 = vld [vmem:[%s3 + $0x168] sm:$0xff]
  %v1645 = vld [vmem:[%s3 + $0x170] sm:$0xff]
  %v1646 = vld [vmem:[%s3 + $0x178] sm:$0xff]
  %v1647 = vld [vmem:[%s3 + $0x180] sm:$0xff]
  %v1648 = vld [vmem:[%s3 + $0x188] sm:$0xff]
  %v1649 = vld [vmem:[%s3 + $0x190] sm:$0xff]
  %v1650 = vld [vmem:[%s3 + $0x198] sm:$0xff]
  %v1651 = vld [vmem:[%s3 + $0x1a0] sm:$0xff]
  %v1652 = vld [vmem:[%s3 + $0x1a8] sm:$0xff]
  %v1653 = vld [vmem:[%s3 + $0x1b0] sm:$0xff]
  %v1654 = vld [vmem:[%s3 + $0x1b8] sm:$0xff]
  %v1655 = vld [vmem:[%s3 + $0x1c0] sm:$0xff]
  %v1656 = vld [vmem:[%s3 + $0x1c8] sm:$0xff]
  %v1657 = vld [vmem:[%s3 + $0x1d0] sm:$0xff]
  %v1658 = vld [vmem:[%s3 + $0x1d8] sm:$0xff]
  %v1659 = vld [vmem:[%s3 + $0x1e0] sm:$0xff]
  %v1660 = vld [vmem:[%s3 + $0x1e8] sm:$0xff]
  %v1661 = vld [vmem:[%s3 + $0x1f0] sm:$0xff]
  %v1662 = vld [vmem:[%s3 + $0x1f8] sm:$0xff]
  %v1663 = vld [vmem:[%s3 + $0x200] sm:$0xff]
  %v1664 = vld [vmem:[%s3 + $0x208] sm:$0xff]
  %v1665 = vld [vmem:[%s3 + $0x210] sm:$0xff]
  %v1666 = vld [vmem:[%s3 + $0x218] sm:$0xff]
  %v1667 = vld [vmem:[%s3 + $0x220] sm:$0xff]
  %v1668 = vld [vmem:[%s3 + $0x228] sm:$0xff]
  %v1669 = vld [vmem:[%s3 + $0x230] sm:$0xff]
  %v1670 = vld [vmem:[%s3 + $0x238] sm:$0xff]
  %v1671 = vld [vmem:[%s3 + $0x240] sm:$0xff]
  %v1672 = vld [vmem:[%s3 + $0x248] sm:$0xff]
  %v1673 = vld [vmem:[%s3 + $0x250] sm:$0xff]
  %v1674 = vld [vmem:[%s3 + $0x258] sm:$0xff]
  %v1675 = vld [vmem:[%s3 + $0x260] sm:$0xff]
  %v1676 = vld [vmem:[%s3 + $0x268] sm:$0xff]
  %v1677 = vld [vmem:[%s3 + $0x270] sm:$0xff]
  %v1678 = vld [vmem:[%s3 + $0x278] sm:$0xff]
  %v1679 = vld [vmem:[%s3 + $0x280] sm:$0xff]
  %v1680 = vld [vmem:[%s3 + $0x288] sm:$0xff]
  %v1681 = vld [vmem:[%s3 + $0x290] sm:$0xff]
  %v1682 = vld [vmem:[%s3 + $0x298] sm:$0xff]
  %v1683 = vld [vmem:[%s3 + $0x2a0] sm:$0xff]
  %v1684 = vld [vmem:[%s3 + $0x2a8] sm:$0xff]
  %v1685 = vld [vmem:[%s3 + $0x2b0] sm:$0xff]
  %v1686 = vld [vmem:[%s3 + $0x2b8] sm:$0xff]
  %v1687 = vld [vmem:[%s3 + $0x2c0] sm:$0xff]
  %v1688 = vld [vmem:[%s3 + $0x2c8] sm:$0xff]
  %v1689 = vld [vmem:[%s3 + $0x2d0] sm:$0xff]
  %v1690 = vld [vmem:[%s3 + $0x2d8] sm:$0xff]
  %v1691 = vld [vmem:[%s3 + $0x2e0] sm:$0xff]
  %v1692 = vld [vmem:[%s3 + $0x2e8] sm:$0xff]
  %v1693 = vld [vmem:[%s3 + $0x2f0] sm:$0xff]
  %v1694 = vld [vmem:[%s3 + $0x2f8] sm:$0xff]
  %v1695 = vld [vmem:[%s3 + $0x300] sm:$0xff]
  %v1696 = vld [vmem:[%s3 + $0x308] sm:$0xff]
  %v1697 = vld [vmem:[%s3 + $0x310] sm:$0xff]
  %v1698 = vld [vmem:[%s3 + $0x318] sm:$0xff]
  %v1699 = vld [vmem:[%s4] sm:$0xf]
  %v1701 = vlaneseq
  %v1702 = vshrl.u32 %v1701, 7
  %v1703 = vsub.s32 0, %v1702
  %v1704 = vrot.slane %v1699, %v1703
  %v1705 = vlaneseq
  %v1706 = vshrl.u32 %v1705, 7
  %v1707 = vsub.s32 1, %v1706
  %v1708 = vrot.slane %v1699, %v1707
  %v1709 = vlaneseq
  %v1710 = vshrl.u32 %v1709, 7
  %v1711 = vsub.s32 2, %v1710
  %v1712 = vrot.slane %v1699, %v1711
  %v1713 = vlaneseq
  %v1714 = vshrl.u32 %v1713, 7
  %v1715 = vsub.s32 3, %v1714
  %v1716 = vrot.slane %v1699, %v1715
  %v1821 = vunpack.c.l.b16 %v1599
  %v1822 = vunpack.c.h.b16 %v1599
  %v1823 = vunpack.c.l.b16 %v1600
  %v1824 = vunpack.c.h.b16 %v1600
  %v1825 = vunpack.c.l.b16 %v1601
  %v1826 = vunpack.c.h.b16 %v1601
  %v1827 = vunpack.c.l.b16 %v1602
  %v1828 = vunpack.c.h.b16 %v1602
  %v1829 = vunpack.c.l.b16 %v1603
  %v1830 = vunpack.c.h.b16 %v1603
  %v1831 = vunpack.c.l.b16 %v1604
  %v1832 = vunpack.c.h.b16 %v1604
  %v1833 = vunpack.c.l.b16 %v1605
  %v1834 = vunpack.c.h.b16 %v1605
  %v1835 = vunpack.c.l.b16 %v1606
  %v1836 = vunpack.c.h.b16 %v1606
  %v1837 = vunpack.c.l.b16 %v1607
  %v1838 = vunpack.c.h.b16 %v1607
  %v1839 = vunpack.c.l.b16 %v1608
  %v1840 = vunpack.c.h.b16 %v1608
  %v1841 = vunpack.c.l.b16 %v1609
  %v1842 = vunpack.c.h.b16 %v1609
  %v1843 = vunpack.c.l.b16 %v1610
  %v1844 = vunpack.c.h.b16 %v1610
  %v1845 = vunpack.c.l.b16 %v1611
  %v1846 = vunpack.c.h.b16 %v1611
  %v1847 = vunpack.c.l.b16 %v1612
  %v1848 = vunpack.c.h.b16 %v1612
  %v1849 = vunpack.c.l.b16 %v1613
  %v1850 = vunpack.c.h.b16 %v1613
  %v1851 = vunpack.c.l.b16 %v1614
  %v1852 = vunpack.c.h.b16 %v1614
  %v1853 = vunpack.c.l.b16 %v1615
  %v1854 = vunpack.c.h.b16 %v1615
  %v1855 = vunpack.c.l.b16 %v1616
  %v1856 = vunpack.c.h.b16 %v1616
  %v1857 = vunpack.c.l.b16 %v1617
  %v1858 = vunpack.c.h.b16 %v1617
  %v1859 = vunpack.c.l.b16 %v1618
  %v1860 = vunpack.c.h.b16 %v1618
  %v1861 = vunpack.c.l.b16 %v1619
  %v1862 = vunpack.c.h.b16 %v1619
  %v1863 = vunpack.c.l.b16 %v1620
  %v1864 = vunpack.c.h.b16 %v1620
  %v1865 = vunpack.c.l.b16 %v1621
  %v1866 = vunpack.c.h.b16 %v1621
  %v1867 = vunpack.c.l.b16 %v1622
  %v1868 = vunpack.c.h.b16 %v1622
  %v1869 = vunpack.c.l.b16 %v1623
  %v1870 = vunpack.c.h.b16 %v1623
  %v1871 = vunpack.c.l.b16 %v1624
  %v1872 = vunpack.c.h.b16 %v1624
  %v1873 = vunpack.c.l.b16 %v1625
  %v1874 = vunpack.c.h.b16 %v1625
  %v1875 = vunpack.c.l.b16 %v1626
  %v1876 = vunpack.c.h.b16 %v1626
  %v1877 = vunpack.c.l.b16 %v1627
  %v1878 = vunpack.c.h.b16 %v1627
  %v1879 = vunpack.c.l.b16 %v1628
  %v1880 = vunpack.c.h.b16 %v1628
  %v1881 = vunpack.c.l.b16 %v1629
  %v1882 = vunpack.c.h.b16 %v1629
  %v1883 = vunpack.c.l.b16 %v1630
  %v1884 = vunpack.c.h.b16 %v1630
  %v1885 = vunpack.c.l.b16 %v1631
  %v1886 = vunpack.c.h.b16 %v1631
  %v1887 = vunpack.c.l.b16 %v1632
  %v1888 = vunpack.c.h.b16 %v1632
  %v1889 = vunpack.c.l.b16 %v1633
  %v1890 = vunpack.c.h.b16 %v1633
  %v1891 = vunpack.c.l.b16 %v1634
  %v1892 = vunpack.c.h.b16 %v1634
  %v1893 = vunpack.c.l.b16 %v1635
  %v1894 = vunpack.c.h.b16 %v1635
  %v1895 = vunpack.c.l.b16 %v1636
  %v1896 = vunpack.c.h.b16 %v1636
  %v1897 = vunpack.c.l.b16 %v1637
  %v1898 = vunpack.c.h.b16 %v1637
  %v1899 = vunpack.c.l.b16 %v1638
  %v1900 = vunpack.c.h.b16 %v1638
  %v1901 = vunpack.c.l.b16 %v1639
  %v1902 = vunpack.c.h.b16 %v1639
  %v1903 = vunpack.c.l.b16 %v1640
  %v1904 = vunpack.c.h.b16 %v1640
  %v1905 = vunpack.c.l.b16 %v1641
  %v1906 = vunpack.c.h.b16 %v1641
  %v1907 = vunpack.c.l.b16 %v1642
  %v1908 = vunpack.c.h.b16 %v1642
  %v1909 = vunpack.c.l.b16 %v1643
  %v1910 = vunpack.c.h.b16 %v1643
  %v1911 = vunpack.c.l.b16 %v1644
  %v1912 = vunpack.c.h.b16 %v1644
  %v1913 = vunpack.c.l.b16 %v1645
  %v1914 = vunpack.c.h.b16 %v1645
  %v1915 = vunpack.c.l.b16 %v1646
  %v1916 = vunpack.c.h.b16 %v1646
  %v1917 = vunpack.c.l.b16 %v1647
  %v1918 = vunpack.c.h.b16 %v1647
  %v1919 = vunpack.c.l.b16 %v1648
  %v1920 = vunpack.c.h.b16 %v1648
  %v1921 = vunpack.c.l.b16 %v1649
  %v1922 = vunpack.c.h.b16 %v1649
  %v1923 = vunpack.c.l.b16 %v1650
  %v1924 = vunpack.c.h.b16 %v1650
  %v1925 = vunpack.c.l.b16 %v1651
  %v1926 = vunpack.c.h.b16 %v1651
  %v1927 = vunpack.c.l.b16 %v1652
  %v1928 = vunpack.c.h.b16 %v1652
  %v1929 = vunpack.c.l.b16 %v1653
  %v1930 = vunpack.c.h.b16 %v1653
  %v1931 = vunpack.c.l.b16 %v1654
  %v1932 = vunpack.c.h.b16 %v1654
  %v1933 = vunpack.c.l.b16 %v1655
  %v1934 = vunpack.c.h.b16 %v1655
  %v1935 = vunpack.c.l.b16 %v1656
  %v1936 = vunpack.c.h.b16 %v1656
  %v1937 = vunpack.c.l.b16 %v1657
  %v1938 = vunpack.c.h.b16 %v1657
  %v1939 = vunpack.c.l.b16 %v1658
  %v1940 = vunpack.c.h.b16 %v1658
  %v1941 = vunpack.c.l.b16 %v1659
  %v1942 = vunpack.c.h.b16 %v1659
  %v1943 = vunpack.c.l.b16 %v1660
  %v1944 = vunpack.c.h.b16 %v1660
  %v1945 = vunpack.c.l.b16 %v1661
  %v1946 = vunpack.c.h.b16 %v1661
  %v1947 = vunpack.c.l.b16 %v1662
  %v1948 = vunpack.c.h.b16 %v1662
  %v1949 = vunpack.c.l.b16 %v1663
  %v1950 = vunpack.c.h.b16 %v1663
  %v1951 = vunpack.c.l.b16 %v1664
  %v1952 = vunpack.c.h.b16 %v1664
  %v1953 = vunpack.c.l.b16 %v1665
  %v1954 = vunpack.c.h.b16 %v1665
  %v1955 = vunpack.c.l.b16 %v1666
  %v1956 = vunpack.c.h.b16 %v1666
  %v1957 = vunpack.c.l.b16 %v1667
  %v1958 = vunpack.c.h.b16 %v1667
  %v1959 = vunpack.c.l.b16 %v1668
  %v1960 = vunpack.c.h.b16 %v1668
  %v1961 = vunpack.c.l.b16 %v1669
  %v1962 = vunpack.c.h.b16 %v1669
  %v1963 = vunpack.c.l.b16 %v1670
  %v1964 = vunpack.c.h.b16 %v1670
  %v1965 = vunpack.c.l.b16 %v1671
  %v1966 = vunpack.c.h.b16 %v1671
  %v1967 = vunpack.c.l.b16 %v1672
  %v1968 = vunpack.c.h.b16 %v1672
  %v1969 = vunpack.c.l.b16 %v1673
  %v1970 = vunpack.c.h.b16 %v1673
  %v1971 = vunpack.c.l.b16 %v1674
  %v1972 = vunpack.c.h.b16 %v1674
  %v1973 = vunpack.c.l.b16 %v1675
  %v1974 = vunpack.c.h.b16 %v1675
  %v1975 = vunpack.c.l.b16 %v1676
  %v1976 = vunpack.c.h.b16 %v1676
  %v1977 = vunpack.c.l.b16 %v1677
  %v1978 = vunpack.c.h.b16 %v1677
  %v1979 = vunpack.c.l.b16 %v1678
  %v1980 = vunpack.c.h.b16 %v1678
  %v1981 = vunpack.c.l.b16 %v1679
  %v1982 = vunpack.c.h.b16 %v1679
  %v1983 = vunpack.c.l.b16 %v1680
  %v1984 = vunpack.c.h.b16 %v1680
  %v1985 = vunpack.c.l.b16 %v1681
  %v1986 = vunpack.c.h.b16 %v1681
  %v1987 = vunpack.c.l.b16 %v1682
  %v1988 = vunpack.c.h.b16 %v1682
  %v1989 = vunpack.c.l.b16 %v1683
  %v1990 = vunpack.c.h.b16 %v1683
  %v1991 = vunpack.c.l.b16 %v1684
  %v1992 = vunpack.c.h.b16 %v1684
  %v1993 = vunpack.c.l.b16 %v1685
  %v1994 = vunpack.c.h.b16 %v1685
  %v1995 = vunpack.c.l.b16 %v1686
  %v1996 = vunpack.c.h.b16 %v1686
  %v1997 = vunpack.c.l.b16 %v1687
  %v1998 = vunpack.c.h.b16 %v1687
  %v1999 = vunpack.c.l.b16 %v1688
  %v2000 = vunpack.c.h.b16 %v1688
  %v2001 = vunpack.c.l.b16 %v1689
  %v2002 = vunpack.c.h.b16 %v1689
  %v2003 = vunpack.c.l.b16 %v1690
  %v2004 = vunpack.c.h.b16 %v1690
  %v2005 = vunpack.c.l.b16 %v1691
  %v2006 = vunpack.c.h.b16 %v1691
  %v2007 = vunpack.c.l.b16 %v1692
  %v2008 = vunpack.c.h.b16 %v1692
  %v2009 = vunpack.c.l.b16 %v1693
  %v2010 = vunpack.c.h.b16 %v1693
  %v2011 = vunpack.c.l.b16 %v1694
  %v2012 = vunpack.c.h.b16 %v1694
  %v2013 = vunpack.c.l.b16 %v1695
  %v2014 = vunpack.c.h.b16 %v1695
  %v2015 = vunpack.c.l.b16 %v1696
  %v2016 = vunpack.c.h.b16 %v1696
  %v2017 = vunpack.c.l.b16 %v1697
  %v2018 = vunpack.c.h.b16 %v1697
  %v2019 = vunpack.c.l.b16 %v1698
  %v2020 = vunpack.c.h.b16 %v1698
  %v2021 = vpack.c.b16 %v1825, %v1821
  %v2022 = vpack.c.b16 %v1826, %v1822
  %v2023 = vpack.c.b16 %v1827, %v1823
  %v2024 = vpack.c.b16 %v1828, %v1824
  %v2025 = vpack.c.b16 %v1833, %v1829
  %v2026 = vpack.c.b16 %v1834, %v1830
  %v2027 = vpack.c.b16 %v1835, %v1831
  %v2028 = vpack.c.b16 %v1836, %v1832
  %v2029 = vpack.c.b16 %v1841, %v1837
  %v2030 = vpack.c.b16 %v1842, %v1838
  %v2031 = vpack.c.b16 %v1843, %v1839
  %v2032 = vpack.c.b16 %v1844, %v1840
  %v2033 = vpack.c.b16 %v1849, %v1845
  %v2034 = vpack.c.b16 %v1850, %v1846
  %v2035 = vpack.c.b16 %v1851, %v1847
  %v2036 = vpack.c.b16 %v1852, %v1848
  %v2037 = vpack.c.b16 %v1857, %v1853
  %v2038 = vpack.c.b16 %v1858, %v1854
  %v2039 = vpack.c.b16 %v1859, %v1855
  %v2040 = vpack.c.b16 %v1860, %v1856
  %v2041 = vpack.c.b16 %v1865, %v1861
  %v2042 = vpack.c.b16 %v1866, %v1862
  %v2043 = vpack.c.b16 %v1867, %v1863
  %v2044 = vpack.c.b16 %v1868, %v1864
  %v2045 = vpack.c.b16 %v1873, %v1869
  %v2046 = vpack.c.b16 %v1874, %v1870
  %v2047 = vpack.c.b16 %v1875, %v1871
  %v2048 = vpack.c.b16 %v1876, %v1872
  %v2049 = vpack.c.b16 %v1881, %v1877
  %v2050 = vpack.c.b16 %v1882, %v1878
  %v2051 = vpack.c.b16 %v1883, %v1879
  %v2052 = vpack.c.b16 %v1884, %v1880
  %v2053 = vpack.c.b16 %v1889, %v1885
  %v2054 = vpack.c.b16 %v1890, %v1886
  %v2055 = vpack.c.b16 %v1891, %v1887
  %v2056 = vpack.c.b16 %v1892, %v1888
  %v2057 = vpack.c.b16 %v1897, %v1893
  %v2058 = vpack.c.b16 %v1898, %v1894
  %v2059 = vpack.c.b16 %v1899, %v1895
  %v2060 = vpack.c.b16 %v1900, %v1896
  %v2061 = vpack.c.b16 %v1905, %v1901
  %v2062 = vpack.c.b16 %v1906, %v1902
  %v2063 = vpack.c.b16 %v1907, %v1903
  %v2064 = vpack.c.b16 %v1908, %v1904
  %v2065 = vpack.c.b16 %v1913, %v1909
  %v2066 = vpack.c.b16 %v1914, %v1910
  %v2067 = vpack.c.b16 %v1915, %v1911
  %v2068 = vpack.c.b16 %v1916, %v1912
  %v2069 = vpack.c.b16 %v1921, %v1917
  %v2070 = vpack.c.b16 %v1922, %v1918
  %v2071 = vpack.c.b16 %v1923, %v1919
  %v2072 = vpack.c.b16 %v1924, %v1920
  %v2073 = vpack.c.b16 %v1929, %v1925
  %v2074 = vpack.c.b16 %v1930, %v1926
  %v2075 = vpack.c.b16 %v1931, %v1927
  %v2076 = vpack.c.b16 %v1932, %v1928
  %v2077 = vpack.c.b16 %v1937, %v1933
  %v2078 = vpack.c.b16 %v1938, %v1934
  %v2079 = vpack.c.b16 %v1939, %v1935
  %v2080 = vpack.c.b16 %v1940, %v1936
  %v2081 = vpack.c.b16 %v1945, %v1941
  %v2082 = vpack.c.b16 %v1946, %v1942
  %v2083 = vpack.c.b16 %v1947, %v1943
  %v2084 = vpack.c.b16 %v1948, %v1944
  %v2085 = vpack.c.b16 %v1953, %v1949
  %v2086 = vpack.c.b16 %v1954, %v1950
  %v2087 = vpack.c.b16 %v1955, %v1951
  %v2088 = vpack.c.b16 %v1956, %v1952
  %v2089 = vpack.c.b16 %v1961, %v1957
  %v2090 = vpack.c.b16 %v1962, %v1958
  %v2091 = vpack.c.b16 %v1963, %v1959
  %v2092 = vpack.c.b16 %v1964, %v1960
  %v2093 = vpack.c.b16 %v1969, %v1965
  %v2094 = vpack.c.b16 %v1970, %v1966
  %v2095 = vpack.c.b16 %v1971, %v1967
  %v2096 = vpack.c.b16 %v1972, %v1968
  %v2097 = vpack.c.b16 %v1977, %v1973
  %v2098 = vpack.c.b16 %v1978, %v1974
  %v2099 = vpack.c.b16 %v1979, %v1975
  %v2100 = vpack.c.b16 %v1980, %v1976
  %v2101 = vpack.c.b16 %v1985, %v1981
  %v2102 = vpack.c.b16 %v1986, %v1982
  %v2103 = vpack.c.b16 %v1987, %v1983
  %v2104 = vpack.c.b16 %v1988, %v1984
  %v2105 = vpack.c.b16 %v1993, %v1989
  %v2106 = vpack.c.b16 %v1994, %v1990
  %v2107 = vpack.c.b16 %v1995, %v1991
  %v2108 = vpack.c.b16 %v1996, %v1992
  %v2109 = vpack.c.b16 %v2001, %v1997
  %v2110 = vpack.c.b16 %v2002, %v1998
  %v2111 = vpack.c.b16 %v2003, %v1999
  %v2112 = vpack.c.b16 %v2004, %v2000
  %v2113 = vpack.c.b16 %v2009, %v2005
  %v2114 = vpack.c.b16 %v2010, %v2006
  %v2115 = vpack.c.b16 %v2011, %v2007
  %v2116 = vpack.c.b16 %v2012, %v2008
  %v2117 = vpack.c.b16 %v2017, %v2013
  %v2118 = vpack.c.b16 %v2018, %v2014
  %v2119 = vpack.c.b16 %v2019, %v2015
  %v2120 = vpack.c.b16 %v2020, %v2016
  %v2222 = vsel %vm1259, %v1598, 0
  %2224 = vmatprep.subr.bf16.mxu0 %v2050
  %2225 = vmatpush1.bf16.msra.mxu0 %v2049
  %2226 = vmatprep.subr.bf16.mxu0 %v2046
  %2227 = vmatpush1.bf16.msra.mxu0 %v2045
  %2228 = vmatprep.subr.bf16.mxu0 %v2042
  %2229 = vmatpush1.bf16.msra.mxu0 %v2041
  %2230 = vmatprep.subr.bf16.mxu0 %v2038
  %2231 = vmatpush1.bf16.msra.mxu0 %v2037
  %2232 = vmatprep.subr.bf16.mxu0 %v2034
  %2233 = vmatpush1.bf16.msra.mxu0 %v2033
  %2234 = vmatprep.subr.bf16.mxu0 %v2030
  %2235 = vmatpush1.bf16.msra.mxu0 %v2029
  %2236 = vmatprep.subr.bf16.mxu0 %v2026
  %2237 = vmatpush1.bf16.msra.mxu0 %v2025
  %2238 = vmatprep.subr.bf16.mxu0 %v2022
  %2239 = vmatpush1.bf16.msra.mxu0 %v2021
  %2240 = vmatprep.subr.bf16.mxu0 %v2082
  %2241 = vmatpush2.bf16.msra.mxu0 %v2081
  %2242 = vmatprep.subr.bf16.mxu0 %v2078
  %2243 = vmatpush2.bf16.msra.mxu0 %v2077
  %2244 = vmatprep.subr.bf16.mxu0 %v2074
  %2245 = vmatpush2.bf16.msra.mxu0 %v2073
  %2246 = vmatprep.subr.bf16.mxu0 %v2070
  %2247 = vmatpush2.bf16.msra.mxu0 %v2069
  %2248 = vmatprep.subr.bf16.mxu0 %v2066
  %2249 = vmatpush2.bf16.msra.mxu0 %v2065
  %2250 = vmatprep.subr.bf16.mxu0 %v2062
  %2251 = vmatpush2.bf16.msra.mxu0 %v2061
  %2252 = vmatprep.subr.bf16.mxu0 %v2058
  %2253 = vmatpush2.bf16.msra.mxu0 %v2057
  %2254 = vmatprep.subr.bf16.mxu0 %v2054
  %2255 = vmatpush2.bf16.msra.mxu0 %v2053
  %2256 = vmatprep.mubr.bf16.mxu0 %v1596
  %2257 = vmatmul.mubr.bf16.gmra.mxu0 %v1595
  %v2258 = vpop.f32.mrf.mxu0
  %v2259 = vadd.f32 %v1704, %v2258
  %v2260 = vpop.f32.mrf.mxu0
  %v2261 = vadd.f32 %v1708, %v2260
  %v2262 = vpop.f32.mrf.mxu0
  %v2263 = vpop.f32.mrf.mxu0
  %2264 = vdwg.mxu0
  %2265 = vmatprep.subr.bf16.mxu0 %v2114
  %2266 = vmatpush1.bf16.msra.mxu0 %v2113
  %2267 = vmatprep.subr.bf16.mxu0 %v2110
  %2268 = vmatpush1.bf16.msra.mxu0 %v2109
  %2269 = vmatprep.subr.bf16.mxu0 %v2106
  %2270 = vmatpush1.bf16.msra.mxu0 %v2105
  %2271 = vmatprep.subr.bf16.mxu0 %v2102
  %2272 = vmatpush1.bf16.msra.mxu0 %v2101
  %2273 = vmatprep.subr.bf16.mxu0 %v2098
  %2274 = vmatpush1.bf16.msra.mxu0 %v2097
  %2275 = vmatprep.subr.bf16.mxu0 %v2094
  %2276 = vmatpush1.bf16.msra.mxu0 %v2093
  %2277 = vmatprep.subr.bf16.mxu0 %v2090
  %2278 = vmatpush1.bf16.msra.mxu0 %v2089
  %2279 = vmatprep.subr.bf16.mxu0 %v2086
  %2280 = vmatpush1.bf16.msra.mxu0 %v2085
  %2281 = vmatprep.subr.bf16.mxu0 0
  %2282 = vmatpush2.bf16.msra.mxu0 0
  %2283 = vmatprep.subr.bf16.mxu0 0
  %2284 = vmatpush2.bf16.msra.mxu0 0
  %2285 = vmatprep.subr.bf16.mxu0 0
  %2286 = vmatpush2.bf16.msra.mxu0 0
  %2287 = vmatprep.subr.bf16.mxu0 0
  %2288 = vmatpush2.bf16.msra.mxu0 0
  %2289 = vmatprep.subr.bf16.mxu0 0
  %2290 = vmatpush2.bf16.msra.mxu0 0
  %2291 = vmatprep.subr.bf16.mxu0 0
  %2292 = vmatpush2.bf16.msra.mxu0 0
  %2293 = vmatprep.subr.bf16.mxu0 0
  %2294 = vmatpush2.bf16.msra.mxu0 0
  %2295 = vmatprep.subr.bf16.mxu0 %v2118
  %2296 = vmatpush2.bf16.msra.mxu0 %v2117
  %2297 = vmatprep.mubr.bf16.mxu0 %v2222
  %2298 = vmatmul.mubr.bf16.gmra.mxu0 %v1597
  %v2299 = vpop.f32.mrf.mxu0
  %v2300 = vadd.f32 %v2259, %v2299
  %v2301 = vpop.f32.mrf.mxu0
  %v2302 = vadd.f32 %v2261, %v2301
  %v2303 = vpop.f32.mrf.mxu0
  %v2304 = vpop.f32.mrf.mxu0
  %2305 = vdwg.mxu0
  %2306 = vmatprep.subr.bf16.mxu0 %v2052
  %2307 = vmatpush1.bf16.msra.mxu0 %v2051
  %2308 = vmatprep.subr.bf16.mxu0 %v2048
  %2309 = vmatpush1.bf16.msra.mxu0 %v2047
  %2310 = vmatprep.subr.bf16.mxu0 %v2044
  %2311 = vmatpush1.bf16.msra.mxu0 %v2043
  %2312 = vmatprep.subr.bf16.mxu0 %v2040
  %2313 = vmatpush1.bf16.msra.mxu0 %v2039
  %2314 = vmatprep.subr.bf16.mxu0 %v2036
  %2315 = vmatpush1.bf16.msra.mxu0 %v2035
  %2316 = vmatprep.subr.bf16.mxu0 %v2032
  %2317 = vmatpush1.bf16.msra.mxu0 %v2031
  %2318 = vmatprep.subr.bf16.mxu0 %v2028
  %2319 = vmatpush1.bf16.msra.mxu0 %v2027
  %2320 = vmatprep.subr.bf16.mxu0 %v2024
  %2321 = vmatpush1.bf16.msra.mxu0 %v2023
  %2322 = vmatprep.subr.bf16.mxu0 %v2084
  %2323 = vmatpush2.bf16.msra.mxu0 %v2083
  %2324 = vmatprep.subr.bf16.mxu0 %v2080
  %2325 = vmatpush2.bf16.msra.mxu0 %v2079
  %2326 = vmatprep.subr.bf16.mxu0 %v2076
  %2327 = vmatpush2.bf16.msra.mxu0 %v2075
  %2328 = vmatprep.subr.bf16.mxu0 %v2072
  %2329 = vmatpush2.bf16.msra.mxu0 %v2071
  %2330 = vmatprep.subr.bf16.mxu0 %v2068
  %2331 = vmatpush2.bf16.msra.mxu0 %v2067
  %2332 = vmatprep.subr.bf16.mxu0 %v2064
  %2333 = vmatpush2.bf16.msra.mxu0 %v2063
  %2334 = vmatprep.subr.bf16.mxu0 %v2060
  %2335 = vmatpush2.bf16.msra.mxu0 %v2059
  %2336 = vmatprep.subr.bf16.mxu0 %v2056
  %2337 = vmatpush2.bf16.msra.mxu0 %v2055
  %2338 = vmatprep.mubr.bf16.mxu0 %v1596
  %2339 = vmatmul.mubr.bf16.gmra.mxu0 %v1595
  %v2340 = vpop.f32.mrf.mxu0
  %v2341 = vadd.f32 %v1712, %v2340
  %v2342 = vpop.f32.mrf.mxu0
  %v2343 = vadd.f32 %v1716, %v2342
  %v2344 = vpop.f32.mrf.mxu0
  %v2345 = vpop.f32.mrf.mxu0
  %2346 = vdwg.mxu0
  %2347 = vmatprep.subr.bf16.mxu0 %v2116
  %2348 = vmatpush1.bf16.msra.mxu0 %v2115
  %2349 = vmatprep.subr.bf16.mxu0 %v2112
  %2350 = vmatpush1.bf16.msra.mxu0 %v2111
  %2351 = vmatprep.subr.bf16.mxu0 %v2108
  %2352 = vmatpush1.bf16.msra.mxu0 %v2107
  %2353 = vmatprep.subr.bf16.mxu0 %v2104
  %2354 = vmatpush1.bf16.msra.mxu0 %v2103
  %2355 = vmatprep.subr.bf16.mxu0 %v2100
  %2356 = vmatpush1.bf16.msra.mxu0 %v2099
  %2357 = vmatprep.subr.bf16.mxu0 %v2096
  %2358 = vmatpush1.bf16.msra.mxu0 %v2095
  %2359 = vmatprep.subr.bf16.mxu0 %v2092
  %2360 = vmatpush1.bf16.msra.mxu0 %v2091
  %2361 = vmatprep.subr.bf16.mxu0 %v2088
  %2362 = vmatpush1.bf16.msra.mxu0 %v2087
  %2363 = vmatprep.subr.bf16.mxu0 0
  %2364 = vmatpush2.bf16.msra.mxu0 0
  %2365 = vmatprep.subr.bf16.mxu0 0
  %2366 = vmatpush2.bf16.msra.mxu0 0
  %2367 = vmatprep.subr.bf16.mxu0 0
  %2368 = vmatpush2.bf16.msra.mxu0 0
  %2369 = vmatprep.subr.bf16.mxu0 0
  %2370 = vmatpush2.bf16.msra.mxu0 0
  %2371 = vmatprep.subr.bf16.mxu0 0
  %2372 = vmatpush2.bf16.msra.mxu0 0
  %2373 = vmatprep.subr.bf16.mxu0 0
  %2374 = vmatpush2.bf16.msra.mxu0 0
  %2375 = vmatprep.subr.bf16.mxu0 0
  %2376 = vmatpush2.bf16.msra.mxu0 0
  %2377 = vmatprep.subr.bf16.mxu0 %v2120
  %2378 = vmatpush2.bf16.msra.mxu0 %v2119
  %2379 = vmatprep.mubr.bf16.mxu0 %v2222
  %2380 = vmatmul.mubr.bf16.gmra.mxu0 %v1597
  %v2381 = vpop.f32.mrf.mxu0
  %v2382 = vadd.f32 %v2341, %v2381
  %v2383 = vpop.f32.mrf.mxu0
  %v2384 = vadd.f32 %v2343, %v2383
  %v2385 = vpop.f32.mrf.mxu0
  %v2386 = vpop.f32.mrf.mxu0
  %2387 = vdwg.mxu0
  %v2388 = vmax.f32 %v2300, 0.0
  %v2389 = vmax.f32 %v2302, 0.0
  %v2390 = vmax.f32 %v2382, 0.0
  %v2391 = vmax.f32 %v2384, 0.0
  %v2392 = vpack.c.bf16 %v2388, %v2388
  %v2393 = vpack.c.bf16 %v2389, %v2389
  %v2394 = vpack.c.bf16 %v2390, %v2390
  %v2395 = vpack.c.bf16 %v2391, %v2391
  %v2396 = vld [vmem:[%s5] sm:$0xff]
  %v2397 = vld [vmem:[%s5 + $0x8] sm:$0xff]
  %v2398 = vld [vmem:[%s5 + $0x10] sm:$0xff]
  %v2399 = vld [vmem:[%s5 + $0x18] sm:$0xff]
  %v2400 = vld [vmem:[%s5 + $0x20] sm:$0xff]
  %v2401 = vld [vmem:[%s5 + $0x28] sm:$0xff]
  %v2402 = vld [vmem:[%s5 + $0x30] sm:$0xff]
  %v2403 = vld [vmem:[%s5 + $0x38] sm:$0xff]
  %v2404 = vld [vmem:[%s5 + $0x40] sm:$0xff]
  %v2405 = vld [vmem:[%s5 + $0x48] sm:$0xff]
  %v2406 = vld [vmem:[%s5 + $0x50] sm:$0xff]
  %v2407 = vld [vmem:[%s5 + $0x58] sm:$0xff]
  %v2408 = vld [vmem:[%s5 + $0x60] sm:$0xff]
  %v2409 = vld [vmem:[%s5 + $0x68] sm:$0xff]
  %v2410 = vld [vmem:[%s5 + $0x70] sm:$0xff]
  %v2411 = vld [vmem:[%s5 + $0x78] sm:$0xff]
  %v2412 = vld [vmem:[%s5 + $0x80] sm:$0xff]
  %v2413 = vld [vmem:[%s5 + $0x88] sm:$0xff]
  %v2414 = vld [vmem:[%s5 + $0x90] sm:$0xff]
  %v2415 = vld [vmem:[%s5 + $0x98] sm:$0xff]
  %v2416 = vld [vmem:[%s5 + $0xa0] sm:$0xff]
  %v2417 = vld [vmem:[%s5 + $0xa8] sm:$0xff]
  %v2418 = vld [vmem:[%s5 + $0xb0] sm:$0xff]
  %v2419 = vld [vmem:[%s5 + $0xb8] sm:$0xff]
  %v2420 = vld [vmem:[%s5 + $0xc0] sm:$0xff]
  %v2421 = vld [vmem:[%s5 + $0xc8] sm:$0xff]
  %v2422 = vld [vmem:[%s5 + $0xd0] sm:$0xff]
  %v2423 = vld [vmem:[%s5 + $0xd8] sm:$0xff]
  %v2424 = vld [vmem:[%s5 + $0xe0] sm:$0xff]
  %v2425 = vld [vmem:[%s5 + $0xe8] sm:$0xff]
  %v2426 = vld [vmem:[%s5 + $0xf0] sm:$0xff]
  %v2427 = vld [vmem:[%s5 + $0xf8] sm:$0xff]
  %v2428 = vld [vmem:[%s5 + $0x100] sm:$0xff]
  %v2429 = vld [vmem:[%s5 + $0x108] sm:$0xff]
  %v2430 = vld [vmem:[%s5 + $0x110] sm:$0xff]
  %v2431 = vld [vmem:[%s5 + $0x118] sm:$0xff]
  %v2432 = vld [vmem:[%s5 + $0x120] sm:$0xff]
  %v2433 = vld [vmem:[%s5 + $0x128] sm:$0xff]
  %v2434 = vld [vmem:[%s5 + $0x130] sm:$0xff]
  %v2435 = vld [vmem:[%s5 + $0x138] sm:$0xff]
  %v2436 = vld [vmem:[%s5 + $0x140] sm:$0xff]
  %v2437 = vld [vmem:[%s5 + $0x148] sm:$0xff]
  %v2438 = vld [vmem:[%s5 + $0x150] sm:$0xff]
  %v2439 = vld [vmem:[%s5 + $0x158] sm:$0xff]
  %v2440 = vld [vmem:[%s5 + $0x160] sm:$0xff]
  %v2441 = vld [vmem:[%s5 + $0x168] sm:$0xff]
  %v2442 = vld [vmem:[%s5 + $0x170] sm:$0xff]
  %v2443 = vld [vmem:[%s5 + $0x178] sm:$0xff]
  %v2444 = vld [vmem:[%s5 + $0x180] sm:$0xff]
  %v2445 = vld [vmem:[%s5 + $0x188] sm:$0xff]
  %v2446 = vld [vmem:[%s6] sm:$0x3]
  %v2448 = vlaneseq
  %v2449 = vshrl.u32 %v2448, 7
  %v2450 = vsub.s32 0, %v2449
  %v2451 = vrot.slane %v2446, %v2450
  %v2452 = vlaneseq
  %v2453 = vshrl.u32 %v2452, 7
  %v2454 = vsub.s32 1, %v2453
  %v2455 = vrot.slane %v2446, %v2454
  %v2508 = vunpack.c.l.b16 %v2396
  %v2509 = vunpack.c.h.b16 %v2396
  %v2510 = vunpack.c.l.b16 %v2397
  %v2511 = vunpack.c.h.b16 %v2397
  %v2512 = vunpack.c.l.b16 %v2398
  %v2513 = vunpack.c.h.b16 %v2398
  %v2514 = vunpack.c.l.b16 %v2399
  %v2515 = vunpack.c.h.b16 %v2399
  %v2516 = vunpack.c.l.b16 %v2400
  %v2517 = vunpack.c.h.b16 %v2400
  %v2518 = vunpack.c.l.b16 %v2401
  %v2519 = vunpack.c.h.b16 %v2401
  %v2520 = vunpack.c.l.b16 %v2402
  %v2521 = vunpack.c.h.b16 %v2402
  %v2522 = vunpack.c.l.b16 %v2403
  %v2523 = vunpack.c.h.b16 %v2403
  %v2524 = vunpack.c.l.b16 %v2404
  %v2525 = vunpack.c.h.b16 %v2404
  %v2526 = vunpack.c.l.b16 %v2405
  %v2527 = vunpack.c.h.b16 %v2405
  %v2528 = vunpack.c.l.b16 %v2406
  %v2529 = vunpack.c.h.b16 %v2406
  %v2530 = vunpack.c.l.b16 %v2407
  %v2531 = vunpack.c.h.b16 %v2407
  %v2532 = vunpack.c.l.b16 %v2408
  %v2533 = vunpack.c.h.b16 %v2408
  %v2534 = vunpack.c.l.b16 %v2409
  %v2535 = vunpack.c.h.b16 %v2409
  %v2536 = vunpack.c.l.b16 %v2410
  %v2537 = vunpack.c.h.b16 %v2410
  %v2538 = vunpack.c.l.b16 %v2411
  %v2539 = vunpack.c.h.b16 %v2411
  %v2540 = vunpack.c.l.b16 %v2412
  %v2541 = vunpack.c.h.b16 %v2412
  %v2542 = vunpack.c.l.b16 %v2413
  %v2543 = vunpack.c.h.b16 %v2413
  %v2544 = vunpack.c.l.b16 %v2414
  %v2545 = vunpack.c.h.b16 %v2414
  %v2546 = vunpack.c.l.b16 %v2415
  %v2547 = vunpack.c.h.b16 %v2415
  %v2548 = vunpack.c.l.b16 %v2416
  %v2549 = vunpack.c.h.b16 %v2416
  %v2550 = vunpack.c.l.b16 %v2417
  %v2551 = vunpack.c.h.b16 %v2417
  %v2552 = vunpack.c.l.b16 %v2418
  %v2553 = vunpack.c.h.b16 %v2418
  %v2554 = vunpack.c.l.b16 %v2419
  %v2555 = vunpack.c.h.b16 %v2419
  %v2556 = vunpack.c.l.b16 %v2420
  %v2557 = vunpack.c.h.b16 %v2420
  %v2558 = vunpack.c.l.b16 %v2421
  %v2559 = vunpack.c.h.b16 %v2421
  %v2560 = vunpack.c.l.b16 %v2422
  %v2561 = vunpack.c.h.b16 %v2422
  %v2562 = vunpack.c.l.b16 %v2423
  %v2563 = vunpack.c.h.b16 %v2423
  %v2564 = vunpack.c.l.b16 %v2424
  %v2565 = vunpack.c.h.b16 %v2424
  %v2566 = vunpack.c.l.b16 %v2425
  %v2567 = vunpack.c.h.b16 %v2425
  %v2568 = vunpack.c.l.b16 %v2426
  %v2569 = vunpack.c.h.b16 %v2426
  %v2570 = vunpack.c.l.b16 %v2427
  %v2571 = vunpack.c.h.b16 %v2427
  %v2572 = vunpack.c.l.b16 %v2428
  %v2573 = vunpack.c.h.b16 %v2428
  %v2574 = vunpack.c.l.b16 %v2429
  %v2575 = vunpack.c.h.b16 %v2429
  %v2576 = vunpack.c.l.b16 %v2430
  %v2577 = vunpack.c.h.b16 %v2430
  %v2578 = vunpack.c.l.b16 %v2431
  %v2579 = vunpack.c.h.b16 %v2431
  %v2580 = vunpack.c.l.b16 %v2432
  %v2581 = vunpack.c.h.b16 %v2432
  %v2582 = vunpack.c.l.b16 %v2433
  %v2583 = vunpack.c.h.b16 %v2433
  %v2584 = vunpack.c.l.b16 %v2434
  %v2585 = vunpack.c.h.b16 %v2434
  %v2586 = vunpack.c.l.b16 %v2435
  %v2587 = vunpack.c.h.b16 %v2435
  %v2588 = vunpack.c.l.b16 %v2436
  %v2589 = vunpack.c.h.b16 %v2436
  %v2590 = vunpack.c.l.b16 %v2437
  %v2591 = vunpack.c.h.b16 %v2437
  %v2592 = vunpack.c.l.b16 %v2438
  %v2593 = vunpack.c.h.b16 %v2438
  %v2594 = vunpack.c.l.b16 %v2439
  %v2595 = vunpack.c.h.b16 %v2439
  %v2596 = vunpack.c.l.b16 %v2440
  %v2597 = vunpack.c.h.b16 %v2440
  %v2598 = vunpack.c.l.b16 %v2441
  %v2599 = vunpack.c.h.b16 %v2441
  %v2600 = vunpack.c.l.b16 %v2442
  %v2601 = vunpack.c.h.b16 %v2442
  %v2602 = vunpack.c.l.b16 %v2443
  %v2603 = vunpack.c.h.b16 %v2443
  %v2604 = vunpack.c.l.b16 %v2444
  %v2605 = vunpack.c.h.b16 %v2444
  %v2606 = vunpack.c.l.b16 %v2445
  %v2607 = vunpack.c.h.b16 %v2445
  %v2608 = vpack.c.b16 %v2510, %v2508
  %v2609 = vpack.c.b16 %v2511, %v2509
  %v2610 = vpack.c.b16 %v2514, %v2512
  %v2611 = vpack.c.b16 %v2515, %v2513
  %v2612 = vpack.c.b16 %v2518, %v2516
  %v2613 = vpack.c.b16 %v2519, %v2517
  %v2614 = vpack.c.b16 %v2522, %v2520
  %v2615 = vpack.c.b16 %v2523, %v2521
  %v2616 = vpack.c.b16 %v2526, %v2524
  %v2617 = vpack.c.b16 %v2527, %v2525
  %v2618 = vpack.c.b16 %v2530, %v2528
  %v2619 = vpack.c.b16 %v2531, %v2529
  %v2620 = vpack.c.b16 %v2534, %v2532
  %v2621 = vpack.c.b16 %v2535, %v2533
  %v2622 = vpack.c.b16 %v2538, %v2536
  %v2623 = vpack.c.b16 %v2539, %v2537
  %v2624 = vpack.c.b16 %v2542, %v2540
  %v2625 = vpack.c.b16 %v2543, %v2541
  %v2626 = vpack.c.b16 %v2546, %v2544
  %v2627 = vpack.c.b16 %v2547, %v2545
  %v2628 = vpack.c.b16 %v2550, %v2548
  %v2629 = vpack.c.b16 %v2551, %v2549
  %v2630 = vpack.c.b16 %v2554, %v2552
  %v2631 = vpack.c.b16 %v2555, %v2553
  %v2632 = vpack.c.b16 %v2558, %v2556
  %v2633 = vpack.c.b16 %v2559, %v2557
  %v2634 = vpack.c.b16 %v2562, %v2560
  %v2635 = vpack.c.b16 %v2563, %v2561
  %v2636 = vpack.c.b16 %v2566, %v2564
  %v2637 = vpack.c.b16 %v2567, %v2565
  %v2638 = vpack.c.b16 %v2570, %v2568
  %v2639 = vpack.c.b16 %v2571, %v2569
  %v2640 = vpack.c.b16 %v2574, %v2572
  %v2641 = vpack.c.b16 %v2575, %v2573
  %v2642 = vpack.c.b16 %v2578, %v2576
  %v2643 = vpack.c.b16 %v2579, %v2577
  %v2644 = vpack.c.b16 %v2582, %v2580
  %v2645 = vpack.c.b16 %v2583, %v2581
  %v2646 = vpack.c.b16 %v2586, %v2584
  %v2647 = vpack.c.b16 %v2587, %v2585
  %v2648 = vpack.c.b16 %v2590, %v2588
  %v2649 = vpack.c.b16 %v2591, %v2589
  %v2650 = vpack.c.b16 %v2594, %v2592
  %v2651 = vpack.c.b16 %v2595, %v2593
  %v2652 = vpack.c.b16 %v2598, %v2596
  %v2653 = vpack.c.b16 %v2599, %v2597
  %v2654 = vpack.c.b16 %v2602, %v2600
  %v2655 = vpack.c.b16 %v2603, %v2601
  %v2656 = vpack.c.b16 %v2606, %v2604
  %v2657 = vpack.c.b16 %v2607, %v2605
  %v2709 = vsel %vm1259, %v2395, 0
  %2711 = vmatprep.subr.bf16.mxu0 %v2623
  %2712 = vmatpush1.bf16.msra.mxu0 %v2622
  %2713 = vmatprep.subr.bf16.mxu0 %v2621
  %2714 = vmatpush1.bf16.msra.mxu0 %v2620
  %2715 = vmatprep.subr.bf16.mxu0 %v2619
  %2716 = vmatpush1.bf16.msra.mxu0 %v2618
  %2717 = vmatprep.subr.bf16.mxu0 %v2617
  %2718 = vmatpush1.bf16.msra.mxu0 %v2616
  %2719 = vmatprep.subr.bf16.mxu0 %v2615
  %2720 = vmatpush1.bf16.msra.mxu0 %v2614
  %2721 = vmatprep.subr.bf16.mxu0 %v2613
  %2722 = vmatpush1.bf16.msra.mxu0 %v2612
  %2723 = vmatprep.subr.bf16.mxu0 %v2611
  %2724 = vmatpush1.bf16.msra.mxu0 %v2610
  %2725 = vmatprep.subr.bf16.mxu0 %v2609
  %2726 = vmatpush1.bf16.msra.mxu0 %v2608
  %2727 = vmatprep.subr.bf16.mxu0 %v2639
  %2728 = vmatpush2.bf16.msra.mxu0 %v2638
  %2729 = vmatprep.subr.bf16.mxu0 %v2637
  %2730 = vmatpush2.bf16.msra.mxu0 %v2636
  %2731 = vmatprep.subr.bf16.mxu0 %v2635
  %2732 = vmatpush2.bf16.msra.mxu0 %v2634
  %2733 = vmatprep.subr.bf16.mxu0 %v2633
  %2734 = vmatpush2.bf16.msra.mxu0 %v2632
  %2735 = vmatprep.subr.bf16.mxu0 %v2631
  %2736 = vmatpush2.bf16.msra.mxu0 %v2630
  %2737 = vmatprep.subr.bf16.mxu0 %v2629
  %2738 = vmatpush2.bf16.msra.mxu0 %v2628
  %2739 = vmatprep.subr.bf16.mxu0 %v2627
  %2740 = vmatpush2.bf16.msra.mxu0 %v2626
  %2741 = vmatprep.subr.bf16.mxu0 %v2625
  %2742 = vmatpush2.bf16.msra.mxu0 %v2624
  %2743 = vmatprep.mubr.bf16.mxu0 %v2393
  %2744 = vmatmul.mubr.bf16.gmra.mxu0 %v2392
  %v2745 = vpop.f32.mrf.mxu0
  %v2746 = vadd.f32 %v2451, %v2745
  %v2747 = vpop.f32.mrf.mxu0
  %v2748 = vadd.f32 %v2455, %v2747
  %v2749 = vpop.f32.mrf.mxu0
  %v2750 = vpop.f32.mrf.mxu0
  %2751 = vdwg.mxu0
  %2752 = vmatprep.subr.bf16.mxu0 %v2655
  %2753 = vmatpush1.bf16.msra.mxu0 %v2654
  %2754 = vmatprep.subr.bf16.mxu0 %v2653
  %2755 = vmatpush1.bf16.msra.mxu0 %v2652
  %2756 = vmatprep.subr.bf16.mxu0 %v2651
  %2757 = vmatpush1.bf16.msra.mxu0 %v2650
  %2758 = vmatprep.subr.bf16.mxu0 %v2649
  %2759 = vmatpush1.bf16.msra.mxu0 %v2648
  %2760 = vmatprep.subr.bf16.mxu0 %v2647
  %2761 = vmatpush1.bf16.msra.mxu0 %v2646
  %2762 = vmatprep.subr.bf16.mxu0 %v2645
  %2763 = vmatpush1.bf16.msra.mxu0 %v2644
  %2764 = vmatprep.subr.bf16.mxu0 %v2643
  %2765 = vmatpush1.bf16.msra.mxu0 %v2642
  %2766 = vmatprep.subr.bf16.mxu0 %v2641
  %2767 = vmatpush1.bf16.msra.mxu0 %v2640
  %2768 = vmatprep.subr.bf16.mxu0 0
  %2769 = vmatpush2.bf16.msra.mxu0 0
  %2770 = vmatprep.subr.bf16.mxu0 0
  %2771 = vmatpush2.bf16.msra.mxu0 0
  %2772 = vmatprep.subr.bf16.mxu0 0
  %2773 = vmatpush2.bf16.msra.mxu0 0
  %2774 = vmatprep.subr.bf16.mxu0 0
  %2775 = vmatpush2.bf16.msra.mxu0 0
  %2776 = vmatprep.subr.bf16.mxu0 0
  %2777 = vmatpush2.bf16.msra.mxu0 0
  %2778 = vmatprep.subr.bf16.mxu0 0
  %2779 = vmatpush2.bf16.msra.mxu0 0
  %2780 = vmatprep.subr.bf16.mxu0 0
  %2781 = vmatpush2.bf16.msra.mxu0 0
  %2782 = vmatprep.subr.bf16.mxu0 %v2657
  %2783 = vmatpush2.bf16.msra.mxu0 %v2656
  %2784 = vmatprep.mubr.bf16.mxu0 %v2709
  %2785 = vmatmul.mubr.bf16.gmra.mxu0 %v2394
  %v2786 = vpop.f32.mrf.mxu0
  %v2787 = vadd.f32 %v2746, %v2786
  %v2788 = vpop.f32.mrf.mxu0
  %v2789 = vadd.f32 %v2748, %v2788
  %v2790 = vpop.f32.mrf.mxu0
  %v2791 = vpop.f32.mrf.mxu0
  %2792 = vdwg.mxu0
  %v2793 = vmax.f32 %v2787, 0.0
  %v2794 = vmax.f32 %v2789, 0.0
  %v2795 = vpack.c.bf16 %v2793, %v2793
  %v2796 = vpack.c.bf16 %v2794, %v2794
  %v2797 = vld [vmem:[%s7] sm:$0xf]
  %v2798 = vld [vmem:[%s7 + $0x4] sm:$0xf]
  %v2799 = vld [vmem:[%s7 + $0x8] sm:$0xf]
  %v2800 = vld [vmem:[%s7 + $0xc] sm:$0xf]
  %v2801 = vld [vmem:[%s7 + $0x10] sm:$0xf]
  %v2802 = vld [vmem:[%s7 + $0x14] sm:$0xf]
  %v2803 = vld [vmem:[%s7 + $0x18] sm:$0xf]
  %v2804 = vld [vmem:[%s7 + $0x1c] sm:$0xf]
  %v2805 = vld [vmem:[%s7 + $0x20] sm:$0xf]
  %v2806 = vld [vmem:[%s7 + $0x24] sm:$0xf]
  %v2807 = vld [vmem:[%s7 + $0x28] sm:$0xf]
  %v2808 = vld [vmem:[%s7 + $0x2c] sm:$0xf]
  %v2809 = vld [vmem:[%s7 + $0x30] sm:$0xf]
  %v2810 = vld [vmem:[%s7 + $0x34] sm:$0xf]
  %v2811 = vld [vmem:[%s7 + $0x38] sm:$0xf]
  %v2812 = vld [vmem:[%s7 + $0x3c] sm:$0xf]
  %v2813 = vld [vmem:[%s7 + $0x40] sm:$0xf]
  %v2814 = vld [vmem:[%s7 + $0x44] sm:$0xf]
  %v2815 = vld [vmem:[%s7 + $0x48] sm:$0xf]
  %v2816 = vld [vmem:[%s7 + $0x4c] sm:$0xf]
  %v2817 = vld [vmem:[%s7 + $0x50] sm:$0xf]
  %v2818 = vld [vmem:[%s7 + $0x54] sm:$0xf]
  %v2819 = vld [vmem:[%s7 + $0x58] sm:$0xf]
  %v2820 = vld [vmem:[%s7 + $0x5c] sm:$0xf]
  %v2821 = vld [vmem:[%s7 + $0x60] sm:$0xf]
  %v2822 = vld [vmem:[%s8] sm:$0x1]
  %v2824 = vlaneseq
  %v2825 = vshrl.u32 %v2824, 7
  %v2826 = vsub.s32 0, %v2825
  %v2827 = vrot.slane %v2822, %v2826
  %v2854 = vunpack.c.l.b16 %v2797
  %v2855 = vunpack.c.l.b16 %v2798
  %v2856 = vunpack.c.l.b16 %v2799
  %v2857 = vunpack.c.l.b16 %v2800
  %v2858 = vunpack.c.l.b16 %v2801
  %v2859 = vunpack.c.l.b16 %v2802
  %v2860 = vunpack.c.l.b16 %v2803
  %v2861 = vunpack.c.l.b16 %v2804
  %v2862 = vunpack.c.l.b16 %v2805
  %v2863 = vunpack.c.l.b16 %v2806
  %v2864 = vunpack.c.l.b16 %v2807
  %v2865 = vunpack.c.l.b16 %v2808
  %v2866 = vunpack.c.l.b16 %v2809
  %v2867 = vunpack.c.l.b16 %v2810
  %v2868 = vunpack.c.l.b16 %v2811
  %v2869 = vunpack.c.l.b16 %v2812
  %v2870 = vunpack.c.l.b16 %v2813
  %v2871 = vunpack.c.l.b16 %v2814
  %v2872 = vunpack.c.l.b16 %v2815
  %v2873 = vunpack.c.l.b16 %v2816
  %v2874 = vunpack.c.l.b16 %v2817
  %v2875 = vunpack.c.l.b16 %v2818
  %v2876 = vunpack.c.l.b16 %v2819
  %v2877 = vunpack.c.l.b16 %v2820
  %v2878 = vunpack.c.l.b16 %v2821
  %v2879 = vpack.c.b16 %v2855, %v2854
  %v2880 = vpack.c.b16 %v2857, %v2856
  %v2881 = vpack.c.b16 %v2859, %v2858
  %v2882 = vpack.c.b16 %v2861, %v2860
  %v2883 = vpack.c.b16 %v2863, %v2862
  %v2884 = vpack.c.b16 %v2865, %v2864
  %v2885 = vpack.c.b16 %v2867, %v2866
  %v2886 = vpack.c.b16 %v2869, %v2868
  %v2887 = vpack.c.b16 %v2871, %v2870
  %v2888 = vpack.c.b16 %v2873, %v2872
  %v2889 = vpack.c.b16 %v2875, %v2874
  %v2890 = vpack.c.b16 %v2877, %v2876
  %v2891 = vpack.c.b16 %v2878, %v2878
  %vm2904 = vcmask 588800
  %v2906 = vsel %vm2904, %v2796, 0
  %vm2908 = vcmask 1043456
  %v2910 = vsel %vm2908, %v2891, 0
  %2912 = vmatprep.subr.bf16.mxu0 0
  %2913 = vmatpush1.bf16.msra.mxu0 %v2886
  %2914 = vmatprep.subr.bf16.mxu0 0
  %2915 = vmatpush1.bf16.msra.mxu0 %v2885
  %2916 = vmatprep.subr.bf16.mxu0 0
  %2917 = vmatpush1.bf16.msra.mxu0 %v2884
  %2918 = vmatprep.subr.bf16.mxu0 0
  %2919 = vmatpush1.bf16.msra.mxu0 %v2883
  %2920 = vmatprep.subr.bf16.mxu0 0
  %2921 = vmatpush1.bf16.msra.mxu0 %v2882
  %2922 = vmatprep.subr.bf16.mxu0 0
  %2923 = vmatpush1.bf16.msra.mxu0 %v2881
  %2924 = vmatprep.subr.bf16.mxu0 0
  %2925 = vmatpush1.bf16.msra.mxu0 %v2880
  %2926 = vmatprep.subr.bf16.mxu0 0
  %2927 = vmatpush1.bf16.msra.mxu0 %v2879
  %2928 = vmatprep.subr.bf16.mxu0 0
  %2929 = vmatpush2.bf16.msra.mxu0 0
  %2930 = vmatprep.subr.bf16.mxu0 0
  %2931 = vmatpush2.bf16.msra.mxu0 0
  %2932 = vmatprep.subr.bf16.mxu0 0
  %2933 = vmatpush2.bf16.msra.mxu0 0
  %2934 = vmatprep.subr.bf16.mxu0 0
  %2935 = vmatpush2.bf16.msra.mxu0 %v2910
  %2936 = vmatprep.subr.bf16.mxu0 0
  %2937 = vmatpush2.bf16.msra.mxu0 %v2890
  %2938 = vmatprep.subr.bf16.mxu0 0
  %2939 = vmatpush2.bf16.msra.mxu0 %v2889
  %2940 = vmatprep.subr.bf16.mxu0 0
  %2941 = vmatpush2.bf16.msra.mxu0 %v2888
  %2942 = vmatprep.subr.bf16.mxu0 0
  %2943 = vmatpush2.bf16.msra.mxu0 %v2887
  %2944 = vmatprep.mubr.bf16.mxu0 %v2906
  %2945 = vmatmul.mubr.bf16.gmra.mxu0 %v2795
  %v2946 = vpop.f32.mrf.mxu0
  %v2947 = vadd.f32 %v2827, %v2946
  %v2948 = vpop.f32.mrf.mxu0
  %v2949 = vpop.f32.mrf.mxu0
  %v2950 = vpop.f32.mrf.mxu0
  %2951 = vdwg.mxu0
  %v2952 = vlaneseq
  %v2953 = vand.u32 %v2952, 127
  %vm2954 = vcmp.lt.s32.totalorder %v2953, 10
  %v2955 = vsel %vm2954, %v2947, -1e+30
  %2956 = vmax.xlane.f32.xlu0 %v2955
  %v2957 = vpop.xlane.xlu0 %2956
  %v2958 = vsub.f32 %v2955, %v2957
  %v2959 = vmul.f32 %v2958, 1.442695
  %v2960 = vpow.pop %v2959
  %2961 = vadd.xlane.f32.xlu0 %v2960
  %v2962 = vpop.xlane.xlu0 %2961
  %v2963 = vlog2.pop %v2962
  %v2964 = vmul.f32 %v2963, 0.6931472
  %v2965 = vsub.f32 %v2958, %v2964
  %2966 = vst [vmem:[%s9] sm:$0xff] %v2965
  // Predicated region
  $region38: #{net_forward.1} parent=0 // pred_check
    _
  $region39: #{net_forward.1} parent=0 // pred_check_branch
    %2968 = sbr.rel (0) target = $region41
  $region40: #{net_forward.1} parent=0 // pred_region
    _
  $region41: #{net_forward.1} parent=0 // pred_fallthru
    _
  // Predicated region
  $region42: #{net_forward.1} parent=0 // pred_check
    _
  $region43: #{net_forward.1} parent=0 // pred_check_branch
    %2970 = sbr.rel (0) target = $region45
  $region44: #{net_forward.1} parent=0 // pred_region
    _
  $region45: #{net_forward.1} parent=0 // pred_fallthru
    _

</llo_original>
